<compile_context>
chip_gen: v5e
topology: v5e:2x2
jax: 0.10.0
libtpu: 0.0.40
codegen_flags: <defaults>
</compile_context>

<pallas_src>
import functools

import jax
import jax.numpy as jnp
from jax import lax
from jax.experimental import pallas as pl
from jax.experimental.pallas import tpu as pltpu


def _dsconv_kernel(x_ref, dw_w_ref, dw_shift_ref, pw_w_ref, pw_shift_ref,
                   out_ref, xpad_ref, dw2d_ref, *,
                   K, P, H, W, Hout, Wout, Cin, Cout):
    """Fused depthwise-separable conv for ONE batch element (NCHW in / out).

    x_ref        : (Cin, H, W)        bf16 input image (batch dim squeezed)
    dw_w_ref     : (Cin, K*K)         f32 depthwise weights, BN scale folded in
    dw_shift_ref : (Cin, 1)           f32 folded depthwise bias + BN shift
    pw_w_ref     : (Cout, Cin)        bf16 pointwise weights, BN scale folded in
    pw_shift_ref : (Cout, 1)          f32 folded pointwise bias + BN shift
    out_ref      : (Cout, Hout*Wout)  f32 output (lane-dense: spatial on lanes)
    xpad_ref     : (Cin, H+2P, W+2P)  f32 scratch: zero-padded image
    dw2d_ref     : (Cin, Hout*Wout)   bf16 scratch: flattened depthwise output
    """
    f32 = jnp.float32
    Hp, Wp = H + 2 * P, W + 2 * P

    # ---- zero-pad this image into VMEM (no HBM padding pass) ---------------
    if P > 0:
        xpad_ref[:, :P, :] = jnp.zeros((Cin, P, Wp), f32)
        xpad_ref[:, Hp - P:, :] = jnp.zeros((Cin, P, Wp), f32)
        xpad_ref[:, :, :P] = jnp.zeros((Cin, Hp, P), f32)
        xpad_ref[:, :, Wp - P:] = jnp.zeros((Cin, Hp, P), f32)
    xpad_ref[:, P:P + H, P:P + W] = x_ref[...].astype(f32)

    # ---- depthwise conv: K*K shifted windows * per-channel weights ---------
    w_all = dw_w_ref[...]            # (Cin, K*K)  loaded once (hoisted)
    dw_shift = dw_shift_ref[...]     # (Cin, 1)
    acc = xpad_ref[:, 0:Hout, 0:Wout] * w_all[:, 0][:, None, None]
    for kh in range(K):
        for kw in range(K):
            if kh == 0 and kw == 0:
                continue
            t = kh * K + kw
            acc = acc + (xpad_ref[:, kh:kh + Hout, kw:kw + Wout]
                         * w_all[:, t][:, None, None])
    # BN scale is already folded into w_all; only shift + ReLU remain.
    dw = jnp.maximum(acc + dw_shift[:, :, None], 0.0)       # (Cin, Hout, Wout)

    # ---- flatten to (Cin, Hout*Wout) through VMEM so the pointwise matmul
    #      operand and the output stores are lane-dense (spatial on lanes) ---
    for h in range(Hout):
        dw2d_ref[:, h * Wout:(h + 1) * Wout] = dw[:, h, :].astype(dw2d_ref.dtype)

    # ---- pointwise 1x1 conv on the MXU: (Cout,Cin) @ (Cin,Hout*Wout) -------
    mm = jnp.dot(pw_w_ref[...], dw2d_ref[...],
                 preferred_element_type=jnp.float32)         # (Cout, Hout*Wout)
    out_ref[...] = jnp.maximum(mm + pw_shift_ref[...], 0.0).astype(out_ref.dtype)


def depth_separable_conv2d(x_nchw, params, *, kernel_size=3, padding=1,
                           compute_dtype=jnp.bfloat16):
    """Forward pass of DepthSeperabelConv2d (stride=1, eval-mode BatchNorm)."""
    N, Cin, H, W = x_nchw.shape
    K, P = kernel_size, padding
    Hout = H + 2 * P - K + 1
    Wout = W + 2 * P - K + 1
    eps = 1e-5

    (dw_w, dw_b, dw_g, dw_beta, dw_mean, dw_var,
     pw_w, pw_b, pw_g, pw_beta, pw_mean, pw_var) = params
    Cout = pw_w.shape[0]

    # ---- fold conv-bias + inference BN into weights (scale) and a shift ----
    dw_scale = dw_g * lax.rsqrt(dw_var + eps)                       # (Cin,)
    dw_shift = dw_scale * (dw_b - dw_mean) + dw_beta                # (Cin,)
    pw_scale = pw_g * lax.rsqrt(pw_var + eps)                       # (Cout,)
    pw_shift = pw_scale * (pw_b - pw_mean) + pw_beta                # (Cout,)

    # torch depthwise weight (Cin,1,K,K) -> (Cin, K*K), scale folded in (f32).
    dw_w_k = (dw_w[:, 0].reshape(Cin, K * K)
              * dw_scale[:, None]).astype(jnp.float32)
    # torch pointwise weight (Cout,Cin,1,1) -> (Cout, Cin), scale folded (bf16).
    pw_w_k = (pw_w[:, :, 0, 0] * pw_scale[:, None]).astype(compute_dtype)

    x = x_nchw.astype(compute_dtype)      # NCHW, bf16; no transpose / no pad

    kernel = functools.partial(_dsconv_kernel, K=K, P=P, H=H, W=W,
                               Hout=Hout, Wout=Wout, Cin=Cin, Cout=Cout)

    # TODO(synk): for very large feature maps / N==1, add halo'd row tiling
    # (grid=(N, Hout//TH)) so both v7x TensorCores get work and intermediates
    # stay within 64 MiB VMEM; the per-image blocks below fit at demo sizes.
    out_flat = pl.pallas_call(
        kernel,
        out_shape=jax.ShapeDtypeStruct((N, Cout, Hout * Wout), jnp.float32),
        grid_spec=pltpu.PrefetchScalarGridSpec(
            num_scalar_prefetch=0,
            grid=(N,),
            in_specs=[
                pl.BlockSpec((None, Cin, H, W), lambda n: (n, 0, 0, 0)),
                pl.BlockSpec((Cin, K * K), lambda n: (0, 0)),
                pl.BlockSpec((Cin, 1), lambda n: (0, 0)),
                pl.BlockSpec((Cout, Cin), lambda n: (0, 0)),
                pl.BlockSpec((Cout, 1), lambda n: (0, 0)),
            ],
            out_specs=pl.BlockSpec((None, Cout, Hout * Wout),
                                   lambda n: (n, 0, 0)),
            scratch_shapes=[
                pltpu.VMEM((Cin, H + 2 * P, W + 2 * P), jnp.float32),
                pltpu.VMEM((Cin, Hout * Wout), compute_dtype),
            ],
        ),
        compiler_params=pltpu.CompilerParams(
            dimension_semantics=("parallel",),
            vmem_limit_bytes=64 * 1024 * 1024),
    )(x, dw_w_k,
      dw_shift.reshape(Cin, 1).astype(jnp.float32),
      pw_w_k,
      pw_shift.reshape(Cout, 1).astype(jnp.float32))

    # (N, Cout, Hout*Wout) -> (N, Cout, Hout, Wout): free metadata reshape.
    return out_flat.reshape(N, Cout, Hout, Wout)


def _reference(x_nchw, params, *, kernel_size=3, padding=1):
    """Plain-JAX f32 reference matching PyTorch semantics (eval-mode BN)."""
    (dw_w, dw_b, dw_g, dw_beta, dw_mean, dw_var,
     pw_w, pw_b, pw_g, pw_beta, pw_mean, pw_var) = params
    eps = 1e-5
    Cin = x_nchw.shape[1]

    y = lax.conv_general_dilated(
        x_nchw, dw_w, window_strides=(1, 1),
        padding=[(padding, padding), (padding, padding)],
        feature_group_count=Cin,
        dimension_numbers=("NCHW", "OIHW", "NCHW"))
    y = y + dw_b[None, :, None, None]
    y = (y - dw_mean[None, :, None, None]) / jnp.sqrt(dw_var + eps)[None, :, None, None]
    y = y * dw_g[None, :, None, None] + dw_beta[None, :, None, None]
    y = jnp.maximum(y, 0.0)

    z = lax.conv_general_dilated(
        y, pw_w, window_strides=(1, 1), padding=[(0, 0), (0, 0)],
        dimension_numbers=("NCHW", "OIHW", "NCHW"))
    z = z + pw_b[None, :, None, None]
    z = (z - pw_mean[None, :, None, None]) / jnp.sqrt(pw_var + eps)[None, :, None, None]
    z = z * pw_g[None, :, None, None] + pw_beta[None, :, None, None]
    return jnp.maximum(z, 0.0)


def _init_params(key, in_channels, out_channels, kernel_size):
    ks = jax.random.split(key, 12)
    Cin, Cout, K = in_channels, out_channels, kernel_size
    dw_w = jax.random.normal(ks[0], (Cin, 1, K, K), jnp.float32) * 0.2
    dw_b = jax.random.normal(ks[1], (Cin,), jnp.float32) * 0.1
    dw_g = 1.0 + 0.1 * jax.random.normal(ks[2], (Cin,), jnp.float32)
    dw_beta = 0.1 * jax.random.normal(ks[3], (Cin,), jnp.float32)
    dw_mean = 0.1 * jax.random.normal(ks[4], (Cin,), jnp.float32)
    dw_var = 0.5 + jnp.abs(jax.random.normal(ks[5], (Cin,), jnp.float32))
    pw_w = jax.random.normal(ks[6], (Cout, Cin, 1, 1), jnp.float32) * 0.2
    pw_b = jax.random.normal(ks[7], (Cout,), jnp.float32) * 0.1
    pw_g = 1.0 + 0.1 * jax.random.normal(ks[8], (Cout,), jnp.float32)
    pw_beta = 0.1 * jax.random.normal(ks[9], (Cout,), jnp.float32)
    pw_mean = 0.1 * jax.random.normal(ks[10], (Cout,), jnp.float32)
    pw_var = 0.5 + jnp.abs(jax.random.normal(ks[11], (Cout,), jnp.float32))
    return (dw_w, dw_b, dw_g, dw_beta, dw_mean, dw_var,
            pw_w, pw_b, pw_g, pw_beta, pw_mean, pw_var)


if __name__ == "__main__":
    N, Cin, Cout, H, W, K = 2, 4, 8, 16, 16, 3

    key = jax.random.PRNGKey(0)
    kx, kp = jax.random.split(key)
    x = jax.random.normal(kx, (N, Cin, H, W), jnp.float32)
    params = _init_params(kp, Cin, Cout, K)

    out = depth_separable_conv2d(x, params, kernel_size=K, padding=1)
    out = jax.block_until_ready(out)

    ref = _reference(x, params, kernel_size=K, padding=1)
    assert out.shape == (N, Cout, H, W), out.shape
    # bf16 activations / weights with f32 accumulation -> ~1% tolerance.
    assert jnp.allclose(out, ref, rtol=5e-2, atol=5e-2), \
        float(jnp.max(jnp.abs(out - ref)))

    print("KERNEL_OK")
</pallas_src>

<mosaic_0001>
module attributes {stable_mosaic.version = 11 : i64} {
  func.func @_dsconv_kernel(%arg0: i32, %arg1: memref<1x4x16x16xbf16, #tpu.memory_space<vmem>>, %arg2: memref<4x9xf32, #tpu.memory_space<vmem>>, %arg3: memref<4x1xf32, #tpu.memory_space<vmem>>, %arg4: memref<8x4xbf16, #tpu.memory_space<vmem>>, %arg5: memref<8x1xf32, #tpu.memory_space<vmem>>, %arg6: memref<1x8x256xf32, #tpu.memory_space<vmem>>, %arg7: memref<4x18x18xf32, #tpu.memory_space<vmem>>, %arg8: memref<4x256xbf16, #tpu.memory_space<vmem>>) attributes {dimension_semantics = [#tpu.dimension_semantics<parallel>], iteration_bounds = array<i64: 2>, scalar_prefetch = 0 : i64, scratch_operands = 2 : i64, tpu.core_type = #tpu.core_type<tc>, window_params = [{transform_indices = @transform_0, window_bounds = array<i64: 1, 4, 16, 16>}, {pipeline_mode = #tpu.pipeline_mode<synchronous>, transform_indices = @transform_1, window_bounds = array<i64: 4, 9>}, {pipeline_mode = #tpu.pipeline_mode<synchronous>, transform_indices = @transform_2, window_bounds = array<i64: 4, 1>}, {pipeline_mode = #tpu.pipeline_mode<synchronous>, transform_indices = @transform_3, window_bounds = array<i64: 8, 4>}, {pipeline_mode = #tpu.pipeline_mode<synchronous>, transform_indices = @transform_4, window_bounds = array<i64: 8, 1>}, {transform_indices = @transform_5, window_bounds = array<i64: 1, 8, 256>}]} {
    %cst = arith.constant 0.000000e+00 : f32
    %0 = vector.broadcast %cst : f32 to vector<4x1x18xf32>
    %c0 = arith.constant 0 : index
    %c0_0 = arith.constant 0 : index
    %c0_1 = arith.constant 0 : index
    %1 = vector.load %arg7[%c0, %c0_0, %c0_1] : memref<4x18x18xf32, #tpu.memory_space<vmem>>, vector<4x1x18xf32>
    tpu.vector_store %arg7[%c0, %c0_0, %c0_1], %0 {strides = array<i32>} : memref<4x18x18xf32, #tpu.memory_space<vmem>>, vector<4x1x18xf32>,
    %cst_2 = arith.constant 0.000000e+00 : f32
    %2 = vector.broadcast %cst_2 : f32 to vector<4x1x18xf32>
    %c0_3 = arith.constant 0 : index
    %c17 = arith.constant 17 : index
    %c0_4 = arith.constant 0 : index
    %3 = vector.load %arg7[%c0_3, %c17, %c0_4] : memref<4x18x18xf32, #tpu.memory_space<vmem>>, vector<4x1x18xf32>
    tpu.vector_store %arg7[%c0_3, %c17, %c0_4], %2 {strides = array<i32>} : memref<4x18x18xf32, #tpu.memory_space<vmem>>, vector<4x1x18xf32>,
    %cst_5 = arith.constant 0.000000e+00 : f32
    %4 = vector.broadcast %cst_5 : f32 to vector<4x18x1xf32>
    %c0_6 = arith.constant 0 : index
    %c0_7 = arith.constant 0 : index
    %c0_8 = arith.constant 0 : index
    %5 = vector.load %arg7[%c0_6, %c0_7, %c0_8] : memref<4x18x18xf32, #tpu.memory_space<vmem>>, vector<4x18x1xf32>
    tpu.vector_store %arg7[%c0_6, %c0_7, %c0_8], %4 {strides = array<i32>} : memref<4x18x18xf32, #tpu.memory_space<vmem>>, vector<4x18x1xf32>,
    %cst_9 = arith.constant 0.000000e+00 : f32
    %6 = vector.broadcast %cst_9 : f32 to vector<4x18x1xf32>
    %c0_10 = arith.constant 0 : index
    %c0_11 = arith.constant 0 : index
    %c17_12 = arith.constant 17 : index
    %7 = vector.load %arg7[%c0_10, %c0_11, %c17_12] : memref<4x18x18xf32, #tpu.memory_space<vmem>>, vector<4x18x1xf32>
    tpu.vector_store %arg7[%c0_10, %c0_11, %c17_12], %6 {strides = array<i32>} : memref<4x18x18xf32, #tpu.memory_space<vmem>>, vector<4x18x1xf32>,
    %c0_13 = arith.constant 0 : index
    %c0_14 = arith.constant 0 : index
    %c0_15 = arith.constant 0 : index
    %c0_16 = arith.constant 0 : index
    %8 = vector.load %arg1[%c0_13, %c0_14, %c0_15, %c0_16] : memref<1x4x16x16xbf16, #tpu.memory_space<vmem>>, vector<1x4x16x16xbf16>
    %9 = vector.shape_cast %8 : vector<1x4x16x16xbf16> to vector<4x16x16xbf16>
    %10 = arith.extf %9 : vector<4x16x16xbf16> to vector<4x16x16xf32>
    %c0_17 = arith.constant 0 : index
    %c1 = arith.constant 1 : index
    %c1_18 = arith.constant 1 : index
    %11 = vector.load %arg7[%c0_17, %c1, %c1_18] : memref<4x18x18xf32, #tpu.memory_space<vmem>>, vector<4x16x16xf32>
    tpu.vector_store %arg7[%c0_17, %c1, %c1_18], %10 {strides = array<i32>} : memref<4x18x18xf32, #tpu.memory_space<vmem>>, vector<4x16x16xf32>,
    %c0_19 = arith.constant 0 : index
    %c0_20 = arith.constant 0 : index
    %12 = vector.load %arg2[%c0_19, %c0_20] : memref<4x9xf32, #tpu.memory_space<vmem>>, vector<4x9xf32>
    %c0_21 = arith.constant 0 : index
    %c0_22 = arith.constant 0 : index
    %13 = vector.load %arg3[%c0_21, %c0_22] : memref<4x1xf32, #tpu.memory_space<vmem>>, vector<4x1xf32>
    %c0_23 = arith.constant 0 : index
    %c0_24 = arith.constant 0 : index
    %c0_25 = arith.constant 0 : index
    %14 = vector.load %arg7[%c0_23, %c0_24, %c0_25] : memref<4x18x18xf32, #tpu.memory_space<vmem>>, vector<4x16x16xf32>
    %15 = vector.extract_strided_slice %12 {offsets = [0, 0], sizes = [4, 1], strides = [1, 1]} : vector<4x9xf32> to vector<4x1xf32>
    %16 = vector.shape_cast %15 : vector<4x1xf32> to vector<4xf32>
    %17 = vector.shape_cast %16 : vector<4xf32> to vector<4x1x1xf32>
    %18 = vector.broadcast %17 : vector<4x1x1xf32> to vector<4x16x16xf32>
    %19 = arith.mulf %14, %18 : vector<4x16x16xf32>
    %c0_26 = arith.constant 0 : index
    %c0_27 = arith.constant 0 : index
    %c1_28 = arith.constant 1 : index
    %20 = vector.load %arg7[%c0_26, %c0_27, %c1_28] : memref<4x18x18xf32, #tpu.memory_space<vmem>>, vector<4x16x16xf32>
    %21 = vector.extract_strided_slice %12 {offsets = [0, 1], sizes = [4, 1], strides = [1, 1]} : vector<4x9xf32> to vector<4x1xf32>
    %22 = vector.shape_cast %21 : vector<4x1xf32> to vector<4xf32>
    %23 = vector.shape_cast %22 : vector<4xf32> to vector<4x1x1xf32>
    %24 = vector.broadcast %23 : vector<4x1x1xf32> to vector<4x16x16xf32>
    %25 = arith.mulf %20, %24 : vector<4x16x16xf32>
    %26 = arith.addf %19, %25 : vector<4x16x16xf32>
    %c0_29 = arith.constant 0 : index
    %c0_30 = arith.constant 0 : index
    %c2 = arith.constant 2 : index
    %27 = vector.load %arg7[%c0_29, %c0_30, %c2] : memref<4x18x18xf32, #tpu.memory_space<vmem>>, vector<4x16x16xf32>
    %28 = vector.extract_strided_slice %12 {offsets = [0, 2], sizes = [4, 1], strides = [1, 1]} : vector<4x9xf32> to vector<4x1xf32>
    %29 = vector.shape_cast %28 : vector<4x1xf32> to vector<4xf32>
    %30 = vector.shape_cast %29 : vector<4xf32> to vector<4x1x1xf32>
    %31 = vector.broadcast %30 : vector<4x1x1xf32> to vector<4x16x16xf32>
    %32 = arith.mulf %27, %31 : vector<4x16x16xf32>
    %33 = arith.addf %26, %32 : vector<4x16x16xf32>
    %c0_31 = arith.constant 0 : index
    %c1_32 = arith.constant 1 : index
    %c0_33 = arith.constant 0 : index
    %34 = vector.load %arg7[%c0_31, %c1_32, %c0_33] : memref<4x18x18xf32, #tpu.memory_space<vmem>>, vector<4x16x16xf32>
    %35 = vector.extract_strided_slice %12 {offsets = [0, 3], sizes = [4, 1], strides = [1, 1]} : vector<4x9xf32> to vector<4x1xf32>
    %36 = vector.shape_cast %35 : vector<4x1xf32> to vector<4xf32>
    %37 = vector.shape_cast %36 : vector<4xf32> to vector<4x1x1xf32>
    %38 = vector.broadcast %37 : vector<4x1x1xf32> to vector<4x16x16xf32>
    %39 = arith.mulf %34, %38 : vector<4x16x16xf32>
    %40 = arith.addf %33, %39 : vector<4x16x16xf32>
    %c0_34 = arith.constant 0 : index
    %c1_35 = arith.constant 1 : index
    %c1_36 = arith.constant 1 : index
    %41 = vector.load %arg7[%c0_34, %c1_35, %c1_36] : memref<4x18x18xf32, #tpu.memory_space<vmem>>, vector<4x16x16xf32>
    %42 = vector.extract_strided_slice %12 {offsets = [0, 4], sizes = [4, 1], strides = [1, 1]} : vector<4x9xf32> to vector<4x1xf32>
    %43 = vector.shape_cast %42 : vector<4x1xf32> to vector<4xf32>
    %44 = vector.shape_cast %43 : vector<4xf32> to vector<4x1x1xf32>
    %45 = vector.broadcast %44 : vector<4x1x1xf32> to vector<4x16x16xf32>
    %46 = arith.mulf %41, %45 : vector<4x16x16xf32>
    %47 = arith.addf %40, %46 : vector<4x16x16xf32>
    %c0_37 = arith.constant 0 : index
    %c1_38 = arith.constant 1 : index
    %c2_39 = arith.constant 2 : index
    %48 = vector.load %arg7[%c0_37, %c1_38, %c2_39] : memref<4x18x18xf32, #tpu.memory_space<vmem>>, vector<4x16x16xf32>
    %49 = vector.extract_strided_slice %12 {offsets = [0, 5], sizes = [4, 1], strides = [1, 1]} : vector<4x9xf32> to vector<4x1xf32>
    %50 = vector.shape_cast %49 : vector<4x1xf32> to vector<4xf32>
    %51 = vector.shape_cast %50 : vector<4xf32> to vector<4x1x1xf32>
    %52 = vector.broadcast %51 : vector<4x1x1xf32> to vector<4x16x16xf32>
    %53 = arith.mulf %48, %52 : vector<4x16x16xf32>
    %54 = arith.addf %47, %53 : vector<4x16x16xf32>
    %c0_40 = arith.constant 0 : index
    %c2_41 = arith.constant 2 : index
    %c0_42 = arith.constant 0 : index
    %55 = vector.load %arg7[%c0_40, %c2_41, %c0_42] : memref<4x18x18xf32, #tpu.memory_space<vmem>>, vector<4x16x16xf32>
    %56 = vector.extract_strided_slice %12 {offsets = [0, 6], sizes = [4, 1], strides = [1, 1]} : vector<4x9xf32> to vector<4x1xf32>
    %57 = vector.shape_cast %56 : vector<4x1xf32> to vector<4xf32>
    %58 = vector.shape_cast %57 : vector<4xf32> to vector<4x1x1xf32>
    %59 = vector.broadcast %58 : vector<4x1x1xf32> to vector<4x16x16xf32>
    %60 = arith.mulf %55, %59 : vector<4x16x16xf32>
    %61 = arith.addf %54, %60 : vector<4x16x16xf32>
    %c0_43 = arith.constant 0 : index
    %c2_44 = arith.constant 2 : index
    %c1_45 = arith.constant 1 : index
    %62 = vector.load %arg7[%c0_43, %c2_44, %c1_45] : memref<4x18x18xf32, #tpu.memory_space<vmem>>, vector<4x16x16xf32>
    %63 = vector.extract_strided_slice %12 {offsets = [0, 7], sizes = [4, 1], strides = [1, 1]} : vector<4x9xf32> to vector<4x1xf32>
    %64 = vector.shape_cast %63 : vector<4x1xf32> to vector<4xf32>
    %65 = vector.shape_cast %64 : vector<4xf32> to vector<4x1x1xf32>
    %66 = vector.broadcast %65 : vector<4x1x1xf32> to vector<4x16x16xf32>
    %67 = arith.mulf %62, %66 : vector<4x16x16xf32>
    %68 = arith.addf %61, %67 : vector<4x16x16xf32>
    %c0_46 = arith.constant 0 : index
    %c2_47 = arith.constant 2 : index
    %c2_48 = arith.constant 2 : index
    %69 = vector.load %arg7[%c0_46, %c2_47, %c2_48] : memref<4x18x18xf32, #tpu.memory_space<vmem>>, vector<4x16x16xf32>
    %70 = vector.extract_strided_slice %12 {offsets = [0, 8], sizes = [4, 1], strides = [1, 1]} : vector<4x9xf32> to vector<4x1xf32>
    %71 = vector.shape_cast %70 : vector<4x1xf32> to vector<4xf32>
    %72 = vector.shape_cast %71 : vector<4xf32> to vector<4x1x1xf32>
    %73 = vector.broadcast %72 : vector<4x1x1xf32> to vector<4x16x16xf32>
    %74 = arith.mulf %69, %73 : vector<4x16x16xf32>
    %75 = arith.addf %68, %74 : vector<4x16x16xf32>
    %76 = vector.shape_cast %13 : vector<4x1xf32> to vector<4x1x1xf32>
    %77 = vector.broadcast %76 : vector<4x1x1xf32> to vector<4x16x16xf32>
    %78 = arith.addf %75, %77 : vector<4x16x16xf32>
    %cst_49 = arith.constant 0.000000e+00 : f32
    %79 = vector.broadcast %cst_49 : f32 to vector<4x16x16xf32>
    %80 = arith.maximumf %78, %79 : vector<4x16x16xf32>
    %81 = vector.extract_strided_slice %80 {offsets = [0, 0, 0], sizes = [4, 1, 16], strides = [1, 1, 1]} : vector<4x16x16xf32> to vector<4x1x16xf32>
    %82 = vector.shape_cast %81 : vector<4x1x16xf32> to vector<4x16xf32>
    %83 = arith.truncf %82 : vector<4x16xf32> to vector<4x16xbf16>
    %c0_50 = arith.constant 0 : index
    %c0_51 = arith.constant 0 : index
    %84 = vector.load %arg8[%c0_50, %c0_51] : memref<4x256xbf16, #tpu.memory_space<vmem>>, vector<4x16xbf16>
    tpu.vector_store %arg8[%c0_50, %c0_51], %83 {strides = array<i32>} : memref<4x256xbf16, #tpu.memory_space<vmem>>, vector<4x16xbf16>,
    %85 = vector.extract_strided_slice %80 {offsets = [0, 1, 0], sizes = [4, 1, 16], strides = [1, 1, 1]} : vector<4x16x16xf32> to vector<4x1x16xf32>
    %86 = vector.shape_cast %85 : vector<4x1x16xf32> to vector<4x16xf32>
    %87 = arith.truncf %86 : vector<4x16xf32> to vector<4x16xbf16>
    %c0_52 = arith.constant 0 : index
    %c16 = arith.constant 16 : index
    %88 = vector.load %arg8[%c0_52, %c16] : memref<4x256xbf16, #tpu.memory_space<vmem>>, vector<4x16xbf16>
    tpu.vector_store %arg8[%c0_52, %c16], %87 {strides = array<i32>} : memref<4x256xbf16, #tpu.memory_space<vmem>>, vector<4x16xbf16>,
    %89 = vector.extract_strided_slice %80 {offsets = [0, 2, 0], sizes = [4, 1, 16], strides = [1, 1, 1]} : vector<4x16x16xf32> to vector<4x1x16xf32>
    %90 = vector.shape_cast %89 : vector<4x1x16xf32> to vector<4x16xf32>
    %91 = arith.truncf %90 : vector<4x16xf32> to vector<4x16xbf16>
    %c0_53 = arith.constant 0 : index
    %c32 = arith.constant 32 : index
    %92 = vector.load %arg8[%c0_53, %c32] : memref<4x256xbf16, #tpu.memory_space<vmem>>, vector<4x16xbf16>
    tpu.vector_store %arg8[%c0_53, %c32], %91 {strides = array<i32>} : memref<4x256xbf16, #tpu.memory_space<vmem>>, vector<4x16xbf16>,
    %93 = vector.extract_strided_slice %80 {offsets = [0, 3, 0], sizes = [4, 1, 16], strides = [1, 1, 1]} : vector<4x16x16xf32> to vector<4x1x16xf32>
    %94 = vector.shape_cast %93 : vector<4x1x16xf32> to vector<4x16xf32>
    %95 = arith.truncf %94 : vector<4x16xf32> to vector<4x16xbf16>
    %c0_54 = arith.constant 0 : index
    %c48 = arith.constant 48 : index
    %96 = vector.load %arg8[%c0_54, %c48] : memref<4x256xbf16, #tpu.memory_space<vmem>>, vector<4x16xbf16>
    tpu.vector_store %arg8[%c0_54, %c48], %95 {strides = array<i32>} : memref<4x256xbf16, #tpu.memory_space<vmem>>, vector<4x16xbf16>,
    %97 = vector.extract_strided_slice %80 {offsets = [0, 4, 0], sizes = [4, 1, 16], strides = [1, 1, 1]} : vector<4x16x16xf32> to vector<4x1x16xf32>
    %98 = vector.shape_cast %97 : vector<4x1x16xf32> to vector<4x16xf32>
    %99 = arith.truncf %98 : vector<4x16xf32> to vector<4x16xbf16>
    %c0_55 = arith.constant 0 : index
    %c64 = arith.constant 64 : index
    %100 = vector.load %arg8[%c0_55, %c64] : memref<4x256xbf16, #tpu.memory_space<vmem>>, vector<4x16xbf16>
    tpu.vector_store %arg8[%c0_55, %c64], %99 {strides = array<i32>} : memref<4x256xbf16, #tpu.memory_space<vmem>>, vector<4x16xbf16>,
    %101 = vector.extract_strided_slice %80 {offsets = [0, 5, 0], sizes = [4, 1, 16], strides = [1, 1, 1]} : vector<4x16x16xf32> to vector<4x1x16xf32>
    %102 = vector.shape_cast %101 : vector<4x1x16xf32> to vector<4x16xf32>
    %103 = arith.truncf %102 : vector<4x16xf32> to vector<4x16xbf16>
    %c0_56 = arith.constant 0 : index
    %c80 = arith.constant 80 : index
    %104 = vector.load %arg8[%c0_56, %c80] : memref<4x256xbf16, #tpu.memory_space<vmem>>, vector<4x16xbf16>
    tpu.vector_store %arg8[%c0_56, %c80], %103 {strides = array<i32>} : memref<4x256xbf16, #tpu.memory_space<vmem>>, vector<4x16xbf16>,
    %105 = vector.extract_strided_slice %80 {offsets = [0, 6, 0], sizes = [4, 1, 16], strides = [1, 1, 1]} : vector<4x16x16xf32> to vector<4x1x16xf32>
    %106 = vector.shape_cast %105 : vector<4x1x16xf32> to vector<4x16xf32>
    %107 = arith.truncf %106 : vector<4x16xf32> to vector<4x16xbf16>
    %c0_57 = arith.constant 0 : index
    %c96 = arith.constant 96 : index
    %108 = vector.load %arg8[%c0_57, %c96] : memref<4x256xbf16, #tpu.memory_space<vmem>>, vector<4x16xbf16>
    tpu.vector_store %arg8[%c0_57, %c96], %107 {strides = array<i32>} : memref<4x256xbf16, #tpu.memory_space<vmem>>, vector<4x16xbf16>,
    %109 = vector.extract_strided_slice %80 {offsets = [0, 7, 0], sizes = [4, 1, 16], strides = [1, 1, 1]} : vector<4x16x16xf32> to vector<4x1x16xf32>
    %110 = vector.shape_cast %109 : vector<4x1x16xf32> to vector<4x16xf32>
    %111 = arith.truncf %110 : vector<4x16xf32> to vector<4x16xbf16>
    %c0_58 = arith.constant 0 : index
    %c112 = arith.constant 112 : index
    %112 = vector.load %arg8[%c0_58, %c112] : memref<4x256xbf16, #tpu.memory_space<vmem>>, vector<4x16xbf16>
    tpu.vector_store %arg8[%c0_58, %c112], %111 {strides = array<i32>} : memref<4x256xbf16, #tpu.memory_space<vmem>>, vector<4x16xbf16>,
    %113 = vector.extract_strided_slice %80 {offsets = [0, 8, 0], sizes = [4, 1, 16], strides = [1, 1, 1]} : vector<4x16x16xf32> to vector<4x1x16xf32>
    %114 = vector.shape_cast %113 : vector<4x1x16xf32> to vector<4x16xf32>
    %115 = arith.truncf %114 : vector<4x16xf32> to vector<4x16xbf16>
    %c0_59 = arith.constant 0 : index
    %c128 = arith.constant 128 : index
    %116 = vector.load %arg8[%c0_59, %c128] : memref<4x256xbf16, #tpu.memory_space<vmem>>, vector<4x16xbf16>
    tpu.vector_store %arg8[%c0_59, %c128], %115 {strides = array<i32>} : memref<4x256xbf16, #tpu.memory_space<vmem>>, vector<4x16xbf16>,
    %117 = vector.extract_strided_slice %80 {offsets = [0, 9, 0], sizes = [4, 1, 16], strides = [1, 1, 1]} : vector<4x16x16xf32> to vector<4x1x16xf32>
    %118 = vector.shape_cast %117 : vector<4x1x16xf32> to vector<4x16xf32>
    %119 = arith.truncf %118 : vector<4x16xf32> to vector<4x16xbf16>
    %c0_60 = arith.constant 0 : index
    %c144 = arith.constant 144 : index
    %120 = vector.load %arg8[%c0_60, %c144] : memref<4x256xbf16, #tpu.memory_space<vmem>>, vector<4x16xbf16>
    tpu.vector_store %arg8[%c0_60, %c144], %119 {strides = array<i32>} : memref<4x256xbf16, #tpu.memory_space<vmem>>, vector<4x16xbf16>,
    %121 = vector.extract_strided_slice %80 {offsets = [0, 10, 0], sizes = [4, 1, 16], strides = [1, 1, 1]} : vector<4x16x16xf32> to vector<4x1x16xf32>
    %122 = vector.shape_cast %121 : vector<4x1x16xf32> to vector<4x16xf32>
    %123 = arith.truncf %122 : vector<4x16xf32> to vector<4x16xbf16>
    %c0_61 = arith.constant 0 : index
    %c160 = arith.constant 160 : index
    %124 = vector.load %arg8[%c0_61, %c160] : memref<4x256xbf16, #tpu.memory_space<vmem>>, vector<4x16xbf16>
    tpu.vector_store %arg8[%c0_61, %c160], %123 {strides = array<i32>} : memref<4x256xbf16, #tpu.memory_space<vmem>>, vector<4x16xbf16>,
    %125 = vector.extract_strided_slice %80 {offsets = [0, 11, 0], sizes = [4, 1, 16], strides = [1, 1, 1]} : vector<4x16x16xf32> to vector<4x1x16xf32>
    %126 = vector.shape_cast %125 : vector<4x1x16xf32> to vector<4x16xf32>
    %127 = arith.truncf %126 : vector<4x16xf32> to vector<4x16xbf16>
    %c0_62 = arith.constant 0 : index
    %c176 = arith.constant 176 : index
    %128 = vector.load %arg8[%c0_62, %c176] : memref<4x256xbf16, #tpu.memory_space<vmem>>, vector<4x16xbf16>
    tpu.vector_store %arg8[%c0_62, %c176], %127 {strides = array<i32>} : memref<4x256xbf16, #tpu.memory_space<vmem>>, vector<4x16xbf16>,
    %129 = vector.extract_strided_slice %80 {offsets = [0, 12, 0], sizes = [4, 1, 16], strides = [1, 1, 1]} : vector<4x16x16xf32> to vector<4x1x16xf32>
    %130 = vector.shape_cast %129 : vector<4x1x16xf32> to vector<4x16xf32>
    %131 = arith.truncf %130 : vector<4x16xf32> to vector<4x16xbf16>
    %c0_63 = arith.constant 0 : index
    %c192 = arith.constant 192 : index
    %132 = vector.load %arg8[%c0_63, %c192] : memref<4x256xbf16, #tpu.memory_space<vmem>>, vector<4x16xbf16>
    tpu.vector_store %arg8[%c0_63, %c192], %131 {strides = array<i32>} : memref<4x256xbf16, #tpu.memory_space<vmem>>, vector<4x16xbf16>,
    %133 = vector.extract_strided_slice %80 {offsets = [0, 13, 0], sizes = [4, 1, 16], strides = [1, 1, 1]} : vector<4x16x16xf32> to vector<4x1x16xf32>
    %134 = vector.shape_cast %133 : vector<4x1x16xf32> to vector<4x16xf32>
    %135 = arith.truncf %134 : vector<4x16xf32> to vector<4x16xbf16>
    %c0_64 = arith.constant 0 : index
    %c208 = arith.constant 208 : index
    %136 = vector.load %arg8[%c0_64, %c208] : memref<4x256xbf16, #tpu.memory_space<vmem>>, vector<4x16xbf16>
    tpu.vector_store %arg8[%c0_64, %c208], %135 {strides = array<i32>} : memref<4x256xbf16, #tpu.memory_space<vmem>>, vector<4x16xbf16>,
    %137 = vector.extract_strided_slice %80 {offsets = [0, 14, 0], sizes = [4, 1, 16], strides = [1, 1, 1]} : vector<4x16x16xf32> to vector<4x1x16xf32>
    %138 = vector.shape_cast %137 : vector<4x1x16xf32> to vector<4x16xf32>
    %139 = arith.truncf %138 : vector<4x16xf32> to vector<4x16xbf16>
    %c0_65 = arith.constant 0 : index
    %c224 = arith.constant 224 : index
    %140 = vector.load %arg8[%c0_65, %c224] : memref<4x256xbf16, #tpu.memory_space<vmem>>, vector<4x16xbf16>
    tpu.vector_store %arg8[%c0_65, %c224], %139 {strides = array<i32>} : memref<4x256xbf16, #tpu.memory_space<vmem>>, vector<4x16xbf16>,
    %141 = vector.extract_strided_slice %80 {offsets = [0, 15, 0], sizes = [4, 1, 16], strides = [1, 1, 1]} : vector<4x16x16xf32> to vector<4x1x16xf32>
    %142 = vector.shape_cast %141 : vector<4x1x16xf32> to vector<4x16xf32>
    %143 = arith.truncf %142 : vector<4x16xf32> to vector<4x16xbf16>
    %c0_66 = arith.constant 0 : index
    %c240 = arith.constant 240 : index
    %144 = vector.load %arg8[%c0_66, %c240] : memref<4x256xbf16, #tpu.memory_space<vmem>>, vector<4x16xbf16>
    tpu.vector_store %arg8[%c0_66, %c240], %143 {strides = array<i32>} : memref<4x256xbf16, #tpu.memory_space<vmem>>, vector<4x16xbf16>,
    %c0_67 = arith.constant 0 : index
    %c0_68 = arith.constant 0 : index
    %145 = vector.load %arg4[%c0_67, %c0_68] : memref<8x4xbf16, #tpu.memory_space<vmem>>, vector<8x4xbf16>
    %c0_69 = arith.constant 0 : index
    %c0_70 = arith.constant 0 : index
    %146 = vector.load %arg8[%c0_69, %c0_70] : memref<4x256xbf16, #tpu.memory_space<vmem>>, vector<4x256xbf16>
    %cst_71 = arith.constant dense<0.000000e+00> : vector<8x256xf32>
    %147 = tpu.matmul %145, %146, %cst_71 {dimension_numbers = #tpu.dot_dimension_numbers<[1], [0], [0], [1], [0, 0, 1, 1], [], []>} : vector<8x4xbf16>, vector<4x256xbf16>, vector<8x256xf32> -> vector<8x256xf32>
    %c0_72 = arith.constant 0 : index
    %c0_73 = arith.constant 0 : index
    %148 = vector.load %arg5[%c0_72, %c0_73] : memref<8x1xf32, #tpu.memory_space<vmem>>, vector<8x1xf32>
    %149 = vector.broadcast %148 : vector<8x1xf32> to vector<8x256xf32>
    %150 = arith.addf %147, %149 : vector<8x256xf32>
    %cst_74 = arith.constant 0.000000e+00 : f32
    %151 = vector.broadcast %cst_74 : f32 to vector<8x256xf32>
    %152 = arith.maximumf %150, %151 : vector<8x256xf32>
    %c0_75 = arith.constant 0 : index
    %c0_76 = arith.constant 0 : index
    %c0_77 = arith.constant 0 : index
    %153 = vector.load %arg6[%c0_75, %c0_76, %c0_77] : memref<1x8x256xf32, #tpu.memory_space<vmem>>, vector<1x8x256xf32>
    %154 = vector.shape_cast %153 : vector<1x8x256xf32> to vector<8x256xf32>
    %155 = vector.shape_cast %152 : vector<8x256xf32> to vector<1x8x256xf32>
    tpu.vector_store %arg6[%c0_75, %c0_76, %c0_77], %155 {strides = array<i32>} : memref<1x8x256xf32, #tpu.memory_space<vmem>>, vector<1x8x256xf32>,
    return
  }
  func.func @transform_0(%arg0: i32) -> (i32, i32, i32, i32) {
    %c0_i32 = arith.constant 0 : i32
    %c0_i32_0 = arith.constant 0 : i32
    %c0_i32_1 = arith.constant 0 : i32
    %c0_i32_2 = arith.constant 0 : i32
    return %arg0, %c0_i32, %c0_i32_0, %c0_i32_1 : i32, i32, i32, i32
  }
  func.func @transform_1(%arg0: i32) -> (i32, i32) {
    %c0_i32 = arith.constant 0 : i32
    %c0_i32_0 = arith.constant 0 : i32
    %c0_i32_1 = arith.constant 0 : i32
    return %c0_i32, %c0_i32_0 : i32, i32
  }
  func.func @transform_2(%arg0: i32) -> (i32, i32) {
    %c0_i32 = arith.constant 0 : i32
    %c0_i32_0 = arith.constant 0 : i32
    %c0_i32_1 = arith.constant 0 : i32
    return %c0_i32, %c0_i32_0 : i32, i32
  }
  func.func @transform_3(%arg0: i32) -> (i32, i32) {
    %c0_i32 = arith.constant 0 : i32
    %c0_i32_0 = arith.constant 0 : i32
    %c0_i32_1 = arith.constant 0 : i32
    return %c0_i32, %c0_i32_0 : i32, i32
  }
  func.func @transform_4(%arg0: i32) -> (i32, i32) {
    %c0_i32 = arith.constant 0 : i32
    %c0_i32_0 = arith.constant 0 : i32
    %c0_i32_1 = arith.constant 0 : i32
    return %c0_i32, %c0_i32_0 : i32, i32
  }
  func.func @transform_5(%arg0: i32) -> (i32, i32, i32) {
    %c0_i32 = arith.constant 0 : i32
    %c0_i32_0 = arith.constant 0 : i32
    %c0_i32_1 = arith.constant 0 : i32
    return %arg0, %c0_i32, %c0_i32_0 : i32, i32, i32
  }
}

</mosaic_0001>

<llo_original>
// kernel: tpu_custom_call.1
$region0: #{tpu_custom_call.1}
  #allocation0 [shape = 'u32[]', space=smem, size = 0x4, offset = 0x4, fixed_abs, tag = 'smem constant byte address 0x4 - core index']
  #allocation1 [shape = 'u32[72,128]{1,0:T(1,128)}', space=vmem, size = 0x9000, scoped, tag = 'internal scratch']
  #allocation2 [shape = 'f32[4,18,18]{2,1,0:T(8,128)}', space=vmem, size = 0xc000, scoped, tag = 'scratch operand']
  #allocation3 [shape = 'bf16[4,256]{1,0:T(4,128)(2,1)}', space=vmem, size = 0x800, scoped, tag = 'scratch operand']
  %s0 = inlined_call_operand.hbm [shape: bf16[2,4,16,16], index: 0, kind: input, shape index: {}]
  %s1 = inlined_call_operand.vmem [shape: f32[4,9], index: 1, kind: input, shape index: {}]
  %s2 = inlined_call_operand.vmem [shape: f32[4,1], index: 2, kind: input, shape index: {}]
  %s3 = inlined_call_operand.vmem [shape: bf16[8,4], index: 3, kind: input, shape index: {}]
  %s4 = inlined_call_operand.vmem [shape: f32[8,1], index: 4, kind: input, shape index: {}]
  %s5 = inlined_call_operand.hbm [shape: f32[2,8,256], index: 5, kind: output, shape index: {}]
  %s6 = sld [smem:[#allocation0]]
  $region57: #{tpu_custom_call.1} parent=0
    _
  %s8 = ssub.s32 1, %s6
  %s9 = scalar_select 0, %s8, %s6
  $region1: #{tpu_custom_call.1} parent=0
    #allocation4 [shape = 'u8[32768]{0}', space=vmem, size = 0x8000, scoped, tag = 'input window, operand 0']
    #allocation5 [shape = 's32[2]{0}', space=sflag, size = 0x8, scoped, tag = 'scoped memory for tpu_custom_call.1']
    #allocation6 [shape = 's32[2]{0}', space=sflag, size = 0x8, scoped, tag = 'scoped memory for tpu_custom_call.1']
    #allocation7 [shape = 'u8[16384]{0}', space=vmem, size = 0x4000, scoped, tag = 'output window, operand 0']
    %10 = vsyncpa [#allocation5], 0
    %s11 = scalar_lea.sflag [#allocation5], 1
    %12 = vsyncpa %s11, 0
    %13 = vsyncpa [#allocation6], 0
    %s14 = scalar_lea.sflag [#allocation6], 1
    %15 = vsyncpa %s14, 0
    loop: start=0, step=1, limit=4
    $region2: #{tpu_custom_call.1} parent=1 // loop_pre_header
      _
    $region3: #{tpu_custom_call.1} parent=1 // loop_header
      %s17 = sphi 0, %s21
      %p18 = scmp.ge.s32.totalorder %s17, 4
      %s27 = sphi 0, %s29
      %s30 = sphi 0, %s27
      %s31 = sphi 0, %s30
      %s47 = sphi 0, %s31
      %s51 = sphi 0, %s51
      %s53 = sphi 0, %s51
      %s54 = sphi 0, %s53
      %s68 = sphi 0, %s54
      %s72 = sphi 0, %s72
      %s74 = sphi 0, %s72
      %s75 = sphi 0, %s74
      %s89 = sphi 0, %s75
      %s93 = sphi 0, %s93
      %s95 = sphi 0, %s93
      %s96 = sphi 0, %s95
      %s110 = sphi 0, %s96
      %s114 = sphi 0, %s114
      %s116 = sphi 0, %s114
      %s117 = sphi 0, %s116
      %s131 = sphi 0, %s117
      %s137 = sphi 0, %s139
      %s140 = sphi 0, %s137
      %s141 = sphi 0, %s140
      %s157 = sphi 0, %s141
    $region4: #{tpu_custom_call.1} parent=1 // loop_header_branch
      %20 = sbr.rel (%p18) target = $region8
    $region5: #{tpu_custom_call.1} parent=1 // loop_body
      %s22 = ssub.s32 %s17, 1
      %s23 = ssub.s32 %s17, 2
      %s24 = sadd.s32 %s17, 1
      %s25 = ssub.s32 %s17, %s24
      %p26 = scmp.eq.s32.totalorder %s25, 0
      %s28 = sadd.s32 %s27, 1
      %s29 = scalar_select %p26, %s27, %s28
      %p32 = pneg %p26
      %p33 = scmp.eq.s32.totalorder %s17, 1
      %p34 = por %p32, %p33
      %p35 = scmp.ne.s32.totalorder %s27, %s30
      %p36 = scmp.eq.s32.totalorder %s17, 0
      %p37 = por %p35, %p36
      %p38 = scmp.ne.s32.totalorder %s27, %s30
      %p39 = scmp.eq.s32.totalorder %s22, 1
      %p40 = por %p38, %p39
      %p41 = scmp.ne.s32.totalorder %s30, %s31
      %p42 = scmp.eq.s32.totalorder %s22, 0
      %p43 = por %p41, %p42
      %p44 = scmp.ne.s32.totalorder %s30, %s31
      %p45 = scmp.eq.s32.totalorder %s23, 1
      %p46 = por %p44, %p45
      %p48 = scmp.ne.s32.totalorder %s31, %s47
      %p49 = scmp.eq.s32.totalorder %s23, 0
      %p50 = por %p48, %p49
      %s52 = sadd.s32 %s51, 1
      %p55 = scmp.eq.s32.totalorder %s17, 1
      %p56 = scmp.ne.s32.totalorder %s51, %s53
      %p57 = scmp.eq.s32.totalorder %s17, 0
      %p58 = por %p56, %p57
      %p59 = scmp.ne.s32.totalorder %s51, %s53
      %p60 = scmp.eq.s32.totalorder %s22, 1
      %p61 = por %p59, %p60
      %p62 = scmp.ne.s32.totalorder %s53, %s54
      %p63 = scmp.eq.s32.totalorder %s22, 0
      %p64 = por %p62, %p63
      %p65 = scmp.ne.s32.totalorder %s53, %s54
      %p66 = scmp.eq.s32.totalorder %s23, 1
      %p67 = por %p65, %p66
      %p69 = scmp.ne.s32.totalorder %s54, %s68
      %p70 = scmp.eq.s32.totalorder %s23, 0
      %p71 = por %p69, %p70
      %s73 = sadd.s32 %s72, 1
      %p76 = scmp.eq.s32.totalorder %s17, 1
      %p77 = scmp.ne.s32.totalorder %s72, %s74
      %p78 = scmp.eq.s32.totalorder %s17, 0
      %p79 = por %p77, %p78
      %p80 = scmp.ne.s32.totalorder %s72, %s74
      %p81 = scmp.eq.s32.totalorder %s22, 1
      %p82 = por %p80, %p81
      %p83 = scmp.ne.s32.totalorder %s74, %s75
      %p84 = scmp.eq.s32.totalorder %s22, 0
      %p85 = por %p83, %p84
      %p86 = scmp.ne.s32.totalorder %s74, %s75
      %p87 = scmp.eq.s32.totalorder %s23, 1
      %p88 = por %p86, %p87
      %p90 = scmp.ne.s32.totalorder %s75, %s89
      %p91 = scmp.eq.s32.totalorder %s23, 0
      %p92 = por %p90, %p91
      %s94 = sadd.s32 %s93, 1
      %p97 = scmp.eq.s32.totalorder %s17, 1
      %p98 = scmp.ne.s32.totalorder %s93, %s95
      %p99 = scmp.eq.s32.totalorder %s17, 0
      %p100 = por %p98, %p99
      %p101 = scmp.ne.s32.totalorder %s93, %s95
      %p102 = scmp.eq.s32.totalorder %s22, 1
      %p103 = por %p101, %p102
      %p104 = scmp.ne.s32.totalorder %s95, %s96
      %p105 = scmp.eq.s32.totalorder %s22, 0
      %p106 = por %p104, %p105
      %p107 = scmp.ne.s32.totalorder %s95, %s96
      %p108 = scmp.eq.s32.totalorder %s23, 1
      %p109 = por %p107, %p108
      %p111 = scmp.ne.s32.totalorder %s96, %s110
      %p112 = scmp.eq.s32.totalorder %s23, 0
      %p113 = por %p111, %p112
      %s115 = sadd.s32 %s114, 1
      %p118 = scmp.eq.s32.totalorder %s17, 1
      %p119 = scmp.ne.s32.totalorder %s114, %s116
      %p120 = scmp.eq.s32.totalorder %s17, 0
      %p121 = por %p119, %p120
      %p122 = scmp.ne.s32.totalorder %s114, %s116
      %p123 = scmp.eq.s32.totalorder %s22, 1
      %p124 = por %p122, %p123
      %p125 = scmp.ne.s32.totalorder %s116, %s117
      %p126 = scmp.eq.s32.totalorder %s22, 0
      %p127 = por %p125, %p126
      %p128 = scmp.ne.s32.totalorder %s116, %s117
      %p129 = scmp.eq.s32.totalorder %s23, 1
      %p130 = por %p128, %p129
      %p132 = scmp.ne.s32.totalorder %s117, %s131
      %p133 = scmp.eq.s32.totalorder %s23, 0
      %p134 = por %p132, %p133
      %s135 = ssub.s32 %s17, %s24
      %p136 = scmp.eq.s32.totalorder %s135, 0
      %s138 = sadd.s32 %s137, 1
      %s139 = scalar_select %p136, %s137, %s138
      %p142 = pneg %p136
      %p143 = scmp.eq.s32.totalorder %s17, 1
      %p144 = por %p142, %p143
      %p145 = scmp.ne.s32.totalorder %s137, %s140
      %p146 = scmp.eq.s32.totalorder %s17, 0
      %p147 = por %p145, %p146
      %p148 = scmp.ne.s32.totalorder %s137, %s140
      %p149 = scmp.eq.s32.totalorder %s22, 1
      %p150 = por %p148, %p149
      %p151 = scmp.ne.s32.totalorder %s140, %s141
      %p152 = scmp.eq.s32.totalorder %s22, 0
      %p153 = por %p151, %p152
      %p154 = scmp.ne.s32.totalorder %s140, %s141
      %p155 = scmp.eq.s32.totalorder %s23, 1
      %p156 = por %p154, %p155
      %p158 = scmp.ne.s32.totalorder %s141, %s157
      %p159 = scmp.eq.s32.totalorder %s23, 0
      %p160 = por %p158, %p159
      %p161 = scmp.le.s32.totalorder 1, %s17
      %p162 = scmp.lt.s32.totalorder %s17, 3
      %p163 = pnand %p161, %p162
      %p164 = pneg %p163
      // Predicated region
      $region9: #{tpu_custom_call.1} parent=5 // pred_check
        _
      $region10: #{tpu_custom_call.1} parent=5 // pred_check_branch
        %166 = sbr.rel (%p163) target = $region12
      $region11: #{tpu_custom_call.1} parent=5 // pred_region
        %s167 = ssub.s32 %s17, 1
        // Predicated region
        $region13: #{tpu_custom_call.1} parent=11 // pred_check
          %p168 = pneg %p64
        $region14: #{tpu_custom_call.1} parent=11 // pred_check_branch
          %170 = sbr.rel (%p168) target = $region16
        $region15: #{tpu_custom_call.1} parent=11 // pred_region
          _
        $region16: #{tpu_custom_call.1} parent=11 // pred_fallthru
          _
        // Predicated region
        $region17: #{tpu_custom_call.1} parent=11 // pred_check
          %p171 = pneg %p85
        $region18: #{tpu_custom_call.1} parent=11 // pred_check_branch
          %173 = sbr.rel (%p171) target = $region20
        $region19: #{tpu_custom_call.1} parent=11 // pred_region
          _
        $region20: #{tpu_custom_call.1} parent=11 // pred_fallthru
          _
        // Predicated region
        $region21: #{tpu_custom_call.1} parent=11 // pred_check
          %p174 = pneg %p106
        $region22: #{tpu_custom_call.1} parent=11 // pred_check_branch
          %176 = sbr.rel (%p174) target = $region24
        $region23: #{tpu_custom_call.1} parent=11 // pred_region
          _
        $region24: #{tpu_custom_call.1} parent=11 // pred_fallthru
          _
        // Predicated region
        $region25: #{tpu_custom_call.1} parent=11 // pred_check
          %p177 = pneg %p127
        $region26: #{tpu_custom_call.1} parent=11 // pred_check_branch
          %179 = sbr.rel (%p177) target = $region28
        $region27: #{tpu_custom_call.1} parent=11 // pred_region
          _
        $region28: #{tpu_custom_call.1} parent=11 // pred_fallthru
          _
      $region12: #{tpu_custom_call.1} parent=5 // pred_fallthru
        _
      %p180 = scmp.lt.s32.totalorder %s17, 2
      // Predicated region
      $region29: #{tpu_custom_call.1} parent=5 // pred_check
        %p181 = pneg %p180
      $region30: #{tpu_custom_call.1} parent=5 // pred_check_branch
        %183 = sbr.rel (%p181) target = $region32
      $region31: #{tpu_custom_call.1} parent=5 // pred_region
        // Predicated region
        $region33: #{tpu_custom_call.1} parent=31 // pred_check
          %p184 = pneg %p37
        $region34: #{tpu_custom_call.1} parent=31 // pred_check_branch
          %186 = sbr.rel (%p184) target = $region36
        $region35: #{tpu_custom_call.1} parent=31 // pred_region
          %s187 = sand.u32 %s27, 1
          %s188 = scalar_lea.sflag [#allocation5], %s187
          %s189 = sand.u32 %s27, 1
          %s190 = smul.addr %s189, 32
          %s191 = scalar_lea.vmem [#allocation4], %s190
          %193 = vsyncadd %s188, 0
          %s194 = smul.addr %s17, 8
          %s195 = smul.addr %s194, 4
          %s196 = scalar_lea.hbm %s0, %s195
          %s197 = sshll.u32 %s196, 4
          %s198 = int_to_ptr.hbm [resolvable:$true] %s197
          %s199 = sshll.u32 %s191, 4
          %s200 = int_to_ptr.vmem [resolvable:$true] %s199
          %205 = dma.hbm_to_vmem [thread:$0]  %s198, 512, %s200, %s188, 64, 64, 4
        $region36: #{tpu_custom_call.1} parent=31 // pred_fallthru
          _
      $region32: #{tpu_custom_call.1} parent=5 // pred_fallthru
        _
      %p206 = scmp.le.s32.totalorder 1, %s17
      %p207 = scmp.lt.s32.totalorder %s17, 3
      %p208 = pnand %p206, %p207
      %p209 = pneg %p208
      // Predicated region
      $region37: #{tpu_custom_call.1} parent=5 // pred_check
        _
      $region38: #{tpu_custom_call.1} parent=5 // pred_check_branch
        %211 = sbr.rel (%p208) target = $region40
      $region39: #{tpu_custom_call.1} parent=5 // pred_region
        %s212 = ssub.s32 %s17, 1
        %s213 = sand.u32 %s30, 1
        %s214 = scalar_lea.sflag [#allocation5], %s213
        %s215 = sand.u32 %s30, 1
        %s216 = smul.addr %s215, 32
        %s217 = scalar_lea.vmem [#allocation4], %s216
        // Predicated region
        $region41: #{tpu_custom_call.1} parent=39 // pred_check
          %p218 = pneg %p43
        $region42: #{tpu_custom_call.1} parent=39 // pred_check_branch
          %220 = sbr.rel (%p218) target = $region44
        $region43: #{tpu_custom_call.1} parent=39 // pred_region
          %222 = dma.done %s214, 512
        $region44: #{tpu_custom_call.1} parent=39 // pred_fallthru
          _
        %s223 = sand.u32 %s30, 1
        %s224 = scalar_lea.sflag [#allocation5], %s223
        %s225 = sand.u32 %s30, 1
        %s226 = smul.addr %s225, 32
        %s227 = scalar_lea.vmem [#allocation4], %s226
        %p228 = pneg %p43
        %p229 = pneg %p40
        %p230 = pneg %p64
        %p231 = pneg %p61
        %p232 = pneg %p85
        %p233 = pneg %p82
        %p234 = pneg %p106
        %p235 = pneg %p103
        %p236 = pneg %p127
        %p237 = pneg %p124
        %p238 = pneg %p153
        %p239 = pneg %p150
        %s240 = sand.u32 %s140, 1
        %s241 = scalar_lea.sflag [#allocation6], %s240
        %s242 = sand.u32 %s140, 1
        %s243 = smul.addr %s242, 16
        %s244 = scalar_lea.vmem [#allocation7], %s243
        %vm246 = vcmask 139264
        %247 = vst.msk [vmem:[#allocation2] sm:$0x1] %vm246, 0.0
        %248 = vst.msk [vmem:[#allocation2 + $0x18] sm:$0x1] %vm246, 0.0
        %249 = vst.msk [vmem:[#allocation2 + $0x30] sm:$0x1] %vm246, 0.0
        %250 = vst.msk [vmem:[#allocation2 + $0x48] sm:$0x1] %vm246, 0.0
        %251 = vst.msk [vmem:[#allocation2 + $0x11] sm:$0x1] %vm246, 0.0
        %252 = vst.msk [vmem:[#allocation2 + $0x29] sm:$0x1] %vm246, 0.0
        %253 = vst.msk [vmem:[#allocation2 + $0x41] sm:$0x1] %vm246, 0.0
        %254 = vst.msk [vmem:[#allocation2 + $0x59] sm:$0x1] %vm246, 0.0
        %vm255 = vcmask 7168
        %256 = vst.msk [vmem:[#allocation2] sm:$0xff] %vm255, 0.0
        %257 = vst.msk [vmem:[#allocation2 + $0x8] sm:$0xff] %vm255, 0.0
        %vm258 = vcmask 1024
        %259 = vst.msk [vmem:[#allocation2 + $0x10] sm:$0x3] %vm258, 0.0
        %260 = vst.msk [vmem:[#allocation2 + $0x18] sm:$0xff] %vm255, 0.0
        %261 = vst.msk [vmem:[#allocation2 + $0x20] sm:$0xff] %vm255, 0.0
        %262 = vst.msk [vmem:[#allocation2 + $0x28] sm:$0x3] %vm258, 0.0
        %263 = vst.msk [vmem:[#allocation2 + $0x30] sm:$0xff] %vm255, 0.0
        %264 = vst.msk [vmem:[#allocation2 + $0x38] sm:$0xff] %vm255, 0.0
        %265 = vst.msk [vmem:[#allocation2 + $0x40] sm:$0x3] %vm258, 0.0
        %266 = vst.msk [vmem:[#allocation2 + $0x48] sm:$0xff] %vm255, 0.0
        %267 = vst.msk [vmem:[#allocation2 + $0x50] sm:$0xff] %vm255, 0.0
        %268 = vst.msk [vmem:[#allocation2 + $0x58] sm:$0x3] %vm258, 0.0
        %vm269 = vcmask 146568
        %270 = vst.msk [vmem:[#allocation2] sm:$0xff] %vm269, 0.0
        %271 = vst.msk [vmem:[#allocation2 + $0x8] sm:$0xff] %vm269, 0.0
        %vm272 = vcmask 140424
        %273 = vst.msk [vmem:[#allocation2 + $0x10] sm:$0x3] %vm272, 0.0
        %274 = vst.msk [vmem:[#allocation2 + $0x18] sm:$0xff] %vm269, 0.0
        %275 = vst.msk [vmem:[#allocation2 + $0x20] sm:$0xff] %vm269, 0.0
        %276 = vst.msk [vmem:[#allocation2 + $0x28] sm:$0x3] %vm272, 0.0
        %277 = vst.msk [vmem:[#allocation2 + $0x30] sm:$0xff] %vm269, 0.0
        %278 = vst.msk [vmem:[#allocation2 + $0x38] sm:$0xff] %vm269, 0.0
        %279 = vst.msk [vmem:[#allocation2 + $0x40] sm:$0x3] %vm272, 0.0
        %280 = vst.msk [vmem:[#allocation2 + $0x48] sm:$0xff] %vm269, 0.0
        %281 = vst.msk [vmem:[#allocation2 + $0x50] sm:$0xff] %vm269, 0.0
        %282 = vst.msk [vmem:[#allocation2 + $0x58] sm:$0x3] %vm272, 0.0
        %v283 = vld [vmem:[%s217] sm:$0xf]
        %v284 = vld [vmem:[%s217 + $0x4] sm:$0xf]
        %v285 = vld [vmem:[%s217 + $0x8] sm:$0xf]
        %v286 = vld [vmem:[%s217 + $0xc] sm:$0xf]
        %v287 = vld [vmem:[%s217 + $0x10] sm:$0xf]
        %v288 = vld [vmem:[%s217 + $0x14] sm:$0xf]
        %v289 = vld [vmem:[%s217 + $0x18] sm:$0xf]
        %v290 = vld [vmem:[%s217 + $0x1c] sm:$0xf]
        %v291 = vunpack.c.l.bf16 %v283
        %v292 = vunpack.c.l.bf16 %v284
        %v293 = vunpack.c.l.bf16 %v285
        %v294 = vunpack.c.l.bf16 %v286
        %v295 = vunpack.c.l.bf16 %v287
        %v296 = vunpack.c.l.bf16 %v288
        %v297 = vunpack.c.l.bf16 %v289
        %v298 = vunpack.c.l.bf16 %v290
        %307 = vrot.lane.b32.xlu0 %v291, 1
        %v308 = vpop.permute.xlu0 %307
        %309 = vrot.lane.b32.xlu0 %v292, 1
        %v310 = vpop.permute.xlu0 %309
        %311 = vrot.lane.b32.xlu0 %v293, 1
        %v312 = vpop.permute.xlu0 %311
        %313 = vrot.lane.b32.xlu0 %v294, 1
        %v314 = vpop.permute.xlu0 %313
        %315 = vrot.lane.b32.xlu0 %v295, 1
        %v316 = vpop.permute.xlu0 %315
        %317 = vrot.lane.b32.xlu0 %v296, 1
        %v318 = vpop.permute.xlu0 %317
        %319 = vrot.lane.b32.xlu0 %v297, 1
        %v320 = vpop.permute.xlu0 %319
        %321 = vrot.lane.b32.xlu0 %v298, 1
        %v322 = vpop.permute.xlu0 %321
        %vm331 = vcmask 138248
        %332 = vst.msk [vmem:[#allocation2 + $0x1] sm:$0xff] %vm331, %v308
        %333 = vst.msk [vmem:[#allocation2 + $0x9] sm:$0xff] %vm331, %v310
        %334 = vst.msk [vmem:[#allocation2 + $0x19] sm:$0xff] %vm331, %v312
        %335 = vst.msk [vmem:[#allocation2 + $0x21] sm:$0xff] %vm331, %v314
        %336 = vst.msk [vmem:[#allocation2 + $0x31] sm:$0xff] %vm331, %v316
        %337 = vst.msk [vmem:[#allocation2 + $0x39] sm:$0xff] %vm331, %v318
        %338 = vst.msk [vmem:[#allocation2 + $0x49] sm:$0xff] %vm331, %v320
        %339 = vst.msk [vmem:[#allocation2 + $0x51] sm:$0xff] %vm331, %v322
        %v340 = vld [vmem:[%s1] sm:$0xf]
        %v341 = vld [vmem:[%s2] sm:$0xf]
        %v342 = vld [vmem:[#allocation2] sm:$0xff]
        %v343 = vld [vmem:[#allocation2 + $0x8] sm:$0xff]
        %v344 = vld [vmem:[#allocation2 + $0x18] sm:$0xff]
        %v345 = vld [vmem:[#allocation2 + $0x20] sm:$0xff]
        %v346 = vld [vmem:[#allocation2 + $0x30] sm:$0xff]
        %v347 = vld [vmem:[#allocation2 + $0x38] sm:$0xff]
        %v348 = vld [vmem:[#allocation2 + $0x48] sm:$0xff]
        %v349 = vld [vmem:[#allocation2 + $0x50] sm:$0xff]
        %v351 = vrot.slane %v340, 1
        %v352 = vrot.slane %v340, 2
        %v353 = vrot.slane %v340, 3
        %v354 = vperm.slane %v340, 0
        %v355 = vperm.slane %v351, 0
        %v356 = vperm.slane %v352, 0
        %v357 = vperm.slane %v353, 0
        %358 = vset.pattern.permute.xlu0 0
        %359 = vperm.xlu0 %358, %v354
        %v360 = vpop.permute.xlu0 %359
        %362 = vset.pattern.permute.xlu0 0
        %363 = vperm.xlu0 %362, %v355
        %v364 = vpop.permute.xlu0 %363
        %366 = vset.pattern.permute.xlu0 0
        %367 = vperm.xlu0 %366, %v356
        %v368 = vpop.permute.xlu0 %367
        %370 = vset.pattern.permute.xlu0 0
        %371 = vperm.xlu0 %370, %v357
        %v372 = vpop.permute.xlu0 %371
        %v374 = vmul.f32 %v342, %v360
        %v375 = vmul.f32 %v343, %v360
        %v376 = vmul.f32 %v344, %v364
        %v377 = vmul.f32 %v345, %v364
        %v378 = vmul.f32 %v346, %v368
        %v379 = vmul.f32 %v347, %v368
        %v380 = vmul.f32 %v348, %v372
        %v381 = vmul.f32 %v349, %v372
        %382 = vset.pattern.permute.xlu0 1
        %383 = vperm.xlu0 %382, %v354
        %v384 = vpop.permute.xlu0 %383
        %386 = vset.pattern.permute.xlu0 1
        %387 = vperm.xlu0 %386, %v355
        %v388 = vpop.permute.xlu0 %387
        %390 = vset.pattern.permute.xlu0 1
        %391 = vperm.xlu0 %390, %v356
        %v392 = vpop.permute.xlu0 %391
        %394 = vset.pattern.permute.xlu0 1
        %395 = vperm.xlu0 %394, %v357
        %v396 = vpop.permute.xlu0 %395
        %v398 = vmul.f32 %v342, %v384
        %v399 = vmul.f32 %v343, %v384
        %v400 = vmul.f32 %v344, %v388
        %v401 = vmul.f32 %v345, %v388
        %v402 = vmul.f32 %v346, %v392
        %v403 = vmul.f32 %v347, %v392
        %v404 = vmul.f32 %v348, %v396
        %v405 = vmul.f32 %v349, %v396
        %414 = vrot.lane.b32.xlu0 %v398, 127
        %v415 = vpop.permute.xlu0 %414
        %416 = vrot.lane.b32.xlu0 %v399, 127
        %v417 = vpop.permute.xlu0 %416
        %418 = vrot.lane.b32.xlu0 %v400, 127
        %v419 = vpop.permute.xlu0 %418
        %420 = vrot.lane.b32.xlu0 %v401, 127
        %v421 = vpop.permute.xlu0 %420
        %422 = vrot.lane.b32.xlu0 %v402, 127
        %v423 = vpop.permute.xlu0 %422
        %424 = vrot.lane.b32.xlu0 %v403, 127
        %v425 = vpop.permute.xlu0 %424
        %426 = vrot.lane.b32.xlu0 %v404, 127
        %v427 = vpop.permute.xlu0 %426
        %428 = vrot.lane.b32.xlu0 %v405, 127
        %v429 = vpop.permute.xlu0 %428
        %v438 = vadd.f32 %v374, %v415
        %v439 = vadd.f32 %v375, %v417
        %v440 = vadd.f32 %v376, %v419
        %v441 = vadd.f32 %v377, %v421
        %v442 = vadd.f32 %v378, %v423
        %v443 = vadd.f32 %v379, %v425
        %v444 = vadd.f32 %v380, %v427
        %v445 = vadd.f32 %v381, %v429
        %446 = vset.pattern.permute.xlu0 2
        %447 = vperm.xlu0 %446, %v354
        %v448 = vpop.permute.xlu0 %447
        %450 = vset.pattern.permute.xlu0 2
        %451 = vperm.xlu0 %450, %v355
        %v452 = vpop.permute.xlu0 %451
        %454 = vset.pattern.permute.xlu0 2
        %455 = vperm.xlu0 %454, %v356
        %v456 = vpop.permute.xlu0 %455
        %458 = vset.pattern.permute.xlu0 2
        %459 = vperm.xlu0 %458, %v357
        %v460 = vpop.permute.xlu0 %459
        %v462 = vmul.f32 %v342, %v448
        %v463 = vmul.f32 %v343, %v448
        %v464 = vmul.f32 %v344, %v452
        %v465 = vmul.f32 %v345, %v452
        %v466 = vmul.f32 %v346, %v456
        %v467 = vmul.f32 %v347, %v456
        %v468 = vmul.f32 %v348, %v460
        %v469 = vmul.f32 %v349, %v460
        %478 = vrot.lane.b32.xlu0 %v462, 126
        %v479 = vpop.permute.xlu0 %478
        %480 = vrot.lane.b32.xlu0 %v463, 126
        %v481 = vpop.permute.xlu0 %480
        %482 = vrot.lane.b32.xlu0 %v464, 126
        %v483 = vpop.permute.xlu0 %482
        %484 = vrot.lane.b32.xlu0 %v465, 126
        %v485 = vpop.permute.xlu0 %484
        %486 = vrot.lane.b32.xlu0 %v466, 126
        %v487 = vpop.permute.xlu0 %486
        %488 = vrot.lane.b32.xlu0 %v467, 126
        %v489 = vpop.permute.xlu0 %488
        %490 = vrot.lane.b32.xlu0 %v468, 126
        %v491 = vpop.permute.xlu0 %490
        %492 = vrot.lane.b32.xlu0 %v469, 126
        %v493 = vpop.permute.xlu0 %492
        %v502 = vadd.f32 %v438, %v479
        %v503 = vadd.f32 %v439, %v481
        %v504 = vadd.f32 %v440, %v483
        %v505 = vadd.f32 %v441, %v485
        %v506 = vadd.f32 %v442, %v487
        %v507 = vadd.f32 %v443, %v489
        %v508 = vadd.f32 %v444, %v491
        %v509 = vadd.f32 %v445, %v493
        %v510 = vld [vmem:[#allocation2 + $0x1] sm:$0xff]
        %v511 = vld [vmem:[#allocation2 + $0x9] sm:$0xff]
        %v512 = vld [vmem:[#allocation2 + $0x19] sm:$0xff]
        %v513 = vld [vmem:[#allocation2 + $0x21] sm:$0xff]
        %v514 = vld [vmem:[#allocation2 + $0x31] sm:$0xff]
        %v515 = vld [vmem:[#allocation2 + $0x39] sm:$0xff]
        %v516 = vld [vmem:[#allocation2 + $0x49] sm:$0xff]
        %v517 = vld [vmem:[#allocation2 + $0x51] sm:$0xff]
        %518 = vset.pattern.permute.xlu0 3
        %519 = vperm.xlu0 %518, %v354
        %v520 = vpop.permute.xlu0 %519
        %522 = vset.pattern.permute.xlu0 3
        %523 = vperm.xlu0 %522, %v355
        %v524 = vpop.permute.xlu0 %523
        %526 = vset.pattern.permute.xlu0 3
        %527 = vperm.xlu0 %526, %v356
        %v528 = vpop.permute.xlu0 %527
        %530 = vset.pattern.permute.xlu0 3
        %531 = vperm.xlu0 %530, %v357
        %v532 = vpop.permute.xlu0 %531
        %v534 = vmul.f32 %v510, %v520
        %v535 = vmul.f32 %v511, %v520
        %v536 = vmul.f32 %v512, %v524
        %v537 = vmul.f32 %v513, %v524
        %v538 = vmul.f32 %v514, %v528
        %v539 = vmul.f32 %v515, %v528
        %v540 = vmul.f32 %v516, %v532
        %v541 = vmul.f32 %v517, %v532
        %v542 = vadd.f32 %v502, %v534
        %v543 = vadd.f32 %v503, %v535
        %v544 = vadd.f32 %v504, %v536
        %v545 = vadd.f32 %v505, %v537
        %v546 = vadd.f32 %v506, %v538
        %v547 = vadd.f32 %v507, %v539
        %v548 = vadd.f32 %v508, %v540
        %v549 = vadd.f32 %v509, %v541
        %550 = vset.pattern.permute.xlu0 4
        %551 = vperm.xlu0 %550, %v354
        %v552 = vpop.permute.xlu0 %551
        %554 = vset.pattern.permute.xlu0 4
        %555 = vperm.xlu0 %554, %v355
        %v556 = vpop.permute.xlu0 %555
        %558 = vset.pattern.permute.xlu0 4
        %559 = vperm.xlu0 %558, %v356
        %v560 = vpop.permute.xlu0 %559
        %562 = vset.pattern.permute.xlu0 4
        %563 = vperm.xlu0 %562, %v357
        %v564 = vpop.permute.xlu0 %563
        %v566 = vmul.f32 %v510, %v552
        %v567 = vmul.f32 %v511, %v552
        %v568 = vmul.f32 %v512, %v556
        %v569 = vmul.f32 %v513, %v556
        %v570 = vmul.f32 %v514, %v560
        %v571 = vmul.f32 %v515, %v560
        %v572 = vmul.f32 %v516, %v564
        %v573 = vmul.f32 %v517, %v564
        %582 = vrot.lane.b32.xlu0 %v566, 127
        %v583 = vpop.permute.xlu0 %582
        %584 = vrot.lane.b32.xlu0 %v567, 127
        %v585 = vpop.permute.xlu0 %584
        %586 = vrot.lane.b32.xlu0 %v568, 127
        %v587 = vpop.permute.xlu0 %586
        %588 = vrot.lane.b32.xlu0 %v569, 127
        %v589 = vpop.permute.xlu0 %588
        %590 = vrot.lane.b32.xlu0 %v570, 127
        %v591 = vpop.permute.xlu0 %590
        %592 = vrot.lane.b32.xlu0 %v571, 127
        %v593 = vpop.permute.xlu0 %592
        %594 = vrot.lane.b32.xlu0 %v572, 127
        %v595 = vpop.permute.xlu0 %594
        %596 = vrot.lane.b32.xlu0 %v573, 127
        %v597 = vpop.permute.xlu0 %596
        %v606 = vadd.f32 %v542, %v583
        %v607 = vadd.f32 %v543, %v585
        %v608 = vadd.f32 %v544, %v587
        %v609 = vadd.f32 %v545, %v589
        %v610 = vadd.f32 %v546, %v591
        %v611 = vadd.f32 %v547, %v593
        %v612 = vadd.f32 %v548, %v595
        %v613 = vadd.f32 %v549, %v597
        %614 = vset.pattern.permute.xlu0 5
        %615 = vperm.xlu0 %614, %v354
        %v616 = vpop.permute.xlu0 %615
        %618 = vset.pattern.permute.xlu0 5
        %619 = vperm.xlu0 %618, %v355
        %v620 = vpop.permute.xlu0 %619
        %622 = vset.pattern.permute.xlu0 5
        %623 = vperm.xlu0 %622, %v356
        %v624 = vpop.permute.xlu0 %623
        %626 = vset.pattern.permute.xlu0 5
        %627 = vperm.xlu0 %626, %v357
        %v628 = vpop.permute.xlu0 %627
        %v630 = vmul.f32 %v510, %v616
        %v631 = vmul.f32 %v511, %v616
        %v632 = vmul.f32 %v512, %v620
        %v633 = vmul.f32 %v513, %v620
        %v634 = vmul.f32 %v514, %v624
        %v635 = vmul.f32 %v515, %v624
        %v636 = vmul.f32 %v516, %v628
        %v637 = vmul.f32 %v517, %v628
        %646 = vrot.lane.b32.xlu0 %v630, 126
        %v647 = vpop.permute.xlu0 %646
        %648 = vrot.lane.b32.xlu0 %v631, 126
        %v649 = vpop.permute.xlu0 %648
        %650 = vrot.lane.b32.xlu0 %v632, 126
        %v651 = vpop.permute.xlu0 %650
        %652 = vrot.lane.b32.xlu0 %v633, 126
        %v653 = vpop.permute.xlu0 %652
        %654 = vrot.lane.b32.xlu0 %v634, 126
        %v655 = vpop.permute.xlu0 %654
        %656 = vrot.lane.b32.xlu0 %v635, 126
        %v657 = vpop.permute.xlu0 %656
        %658 = vrot.lane.b32.xlu0 %v636, 126
        %v659 = vpop.permute.xlu0 %658
        %660 = vrot.lane.b32.xlu0 %v637, 126
        %v661 = vpop.permute.xlu0 %660
        %v670 = vadd.f32 %v606, %v647
        %v671 = vadd.f32 %v607, %v649
        %v672 = vadd.f32 %v608, %v651
        %v673 = vadd.f32 %v609, %v653
        %v674 = vadd.f32 %v610, %v655
        %v675 = vadd.f32 %v611, %v657
        %v676 = vadd.f32 %v612, %v659
        %v677 = vadd.f32 %v613, %v661
        %v678 = vld [vmem:[#allocation2 + $0x2] sm:$0xff]
        %v679 = vld [vmem:[#allocation2 + $0xa] sm:$0xff]
        %v680 = vld [vmem:[#allocation2 + $0x1a] sm:$0xff]
        %v681 = vld [vmem:[#allocation2 + $0x22] sm:$0xff]
        %v682 = vld [vmem:[#allocation2 + $0x32] sm:$0xff]
        %v683 = vld [vmem:[#allocation2 + $0x3a] sm:$0xff]
        %v684 = vld [vmem:[#allocation2 + $0x4a] sm:$0xff]
        %v685 = vld [vmem:[#allocation2 + $0x52] sm:$0xff]
        %686 = vset.pattern.permute.xlu0 6
        %687 = vperm.xlu0 %686, %v354
        %v688 = vpop.permute.xlu0 %687
        %690 = vset.pattern.permute.xlu0 6
        %691 = vperm.xlu0 %690, %v355
        %v692 = vpop.permute.xlu0 %691
        %694 = vset.pattern.permute.xlu0 6
        %695 = vperm.xlu0 %694, %v356
        %v696 = vpop.permute.xlu0 %695
        %698 = vset.pattern.permute.xlu0 6
        %699 = vperm.xlu0 %698, %v357
        %v700 = vpop.permute.xlu0 %699
        %v702 = vmul.f32 %v678, %v688
        %v703 = vmul.f32 %v679, %v688
        %v704 = vmul.f32 %v680, %v692
        %v705 = vmul.f32 %v681, %v692
        %v706 = vmul.f32 %v682, %v696
        %v707 = vmul.f32 %v683, %v696
        %v708 = vmul.f32 %v684, %v700
        %v709 = vmul.f32 %v685, %v700
        %v710 = vadd.f32 %v670, %v702
        %v711 = vadd.f32 %v671, %v703
        %v712 = vadd.f32 %v672, %v704
        %v713 = vadd.f32 %v673, %v705
        %v714 = vadd.f32 %v674, %v706
        %v715 = vadd.f32 %v675, %v707
        %v716 = vadd.f32 %v676, %v708
        %v717 = vadd.f32 %v677, %v709
        %718 = vset.pattern.permute.xlu0 7
        %719 = vperm.xlu0 %718, %v354
        %v720 = vpop.permute.xlu0 %719
        %722 = vset.pattern.permute.xlu0 7
        %723 = vperm.xlu0 %722, %v355
        %v724 = vpop.permute.xlu0 %723
        %726 = vset.pattern.permute.xlu0 7
        %727 = vperm.xlu0 %726, %v356
        %v728 = vpop.permute.xlu0 %727
        %730 = vset.pattern.permute.xlu0 7
        %731 = vperm.xlu0 %730, %v357
        %v732 = vpop.permute.xlu0 %731
        %v734 = vmul.f32 %v678, %v720
        %v735 = vmul.f32 %v679, %v720
        %v736 = vmul.f32 %v680, %v724
        %v737 = vmul.f32 %v681, %v724
        %v738 = vmul.f32 %v682, %v728
        %v739 = vmul.f32 %v683, %v728
        %v740 = vmul.f32 %v684, %v732
        %v741 = vmul.f32 %v685, %v732
        %750 = vrot.lane.b32.xlu0 %v734, 127
        %v751 = vpop.permute.xlu0 %750
        %752 = vrot.lane.b32.xlu0 %v735, 127
        %v753 = vpop.permute.xlu0 %752
        %754 = vrot.lane.b32.xlu0 %v736, 127
        %v755 = vpop.permute.xlu0 %754
        %756 = vrot.lane.b32.xlu0 %v737, 127
        %v757 = vpop.permute.xlu0 %756
        %758 = vrot.lane.b32.xlu0 %v738, 127
        %v759 = vpop.permute.xlu0 %758
        %760 = vrot.lane.b32.xlu0 %v739, 127
        %v761 = vpop.permute.xlu0 %760
        %762 = vrot.lane.b32.xlu0 %v740, 127
        %v763 = vpop.permute.xlu0 %762
        %764 = vrot.lane.b32.xlu0 %v741, 127
        %v765 = vpop.permute.xlu0 %764
        %v774 = vadd.f32 %v710, %v751
        %v775 = vadd.f32 %v711, %v753
        %v776 = vadd.f32 %v712, %v755
        %v777 = vadd.f32 %v713, %v757
        %v778 = vadd.f32 %v714, %v759
        %v779 = vadd.f32 %v715, %v761
        %v780 = vadd.f32 %v716, %v763
        %v781 = vadd.f32 %v717, %v765
        %782 = vset.pattern.permute.xlu0 8
        %783 = vperm.xlu0 %782, %v354
        %v784 = vpop.permute.xlu0 %783
        %786 = vset.pattern.permute.xlu0 8
        %787 = vperm.xlu0 %786, %v355
        %v788 = vpop.permute.xlu0 %787
        %790 = vset.pattern.permute.xlu0 8
        %791 = vperm.xlu0 %790, %v356
        %v792 = vpop.permute.xlu0 %791
        %794 = vset.pattern.permute.xlu0 8
        %795 = vperm.xlu0 %794, %v357
        %v796 = vpop.permute.xlu0 %795
        %v798 = vmul.f32 %v678, %v784
        %v799 = vmul.f32 %v679, %v784
        %v800 = vmul.f32 %v680, %v788
        %v801 = vmul.f32 %v681, %v788
        %v802 = vmul.f32 %v682, %v792
        %v803 = vmul.f32 %v683, %v792
        %v804 = vmul.f32 %v684, %v796
        %v805 = vmul.f32 %v685, %v796
        %814 = vrot.lane.b32.xlu0 %v798, 126
        %v815 = vpop.permute.xlu0 %814
        %816 = vrot.lane.b32.xlu0 %v799, 126
        %v817 = vpop.permute.xlu0 %816
        %818 = vrot.lane.b32.xlu0 %v800, 126
        %v819 = vpop.permute.xlu0 %818
        %820 = vrot.lane.b32.xlu0 %v801, 126
        %v821 = vpop.permute.xlu0 %820
        %822 = vrot.lane.b32.xlu0 %v802, 126
        %v823 = vpop.permute.xlu0 %822
        %824 = vrot.lane.b32.xlu0 %v803, 126
        %v825 = vpop.permute.xlu0 %824
        %826 = vrot.lane.b32.xlu0 %v804, 126
        %v827 = vpop.permute.xlu0 %826
        %828 = vrot.lane.b32.xlu0 %v805, 126
        %v829 = vpop.permute.xlu0 %828
        %v838 = vadd.f32 %v774, %v815
        %v839 = vadd.f32 %v775, %v817
        %v840 = vadd.f32 %v776, %v819
        %v841 = vadd.f32 %v777, %v821
        %v842 = vadd.f32 %v778, %v823
        %v843 = vadd.f32 %v779, %v825
        %v844 = vadd.f32 %v780, %v827
        %v845 = vadd.f32 %v781, %v829
        %v847 = vrot.slane %v341, 1
        %v848 = vrot.slane %v341, 2
        %v849 = vrot.slane %v341, 3
        %v850 = vperm.slane %v341, 0
        %v851 = vperm.slane %v847, 0
        %v852 = vperm.slane %v848, 0
        %v853 = vperm.slane %v849, 0
        %854 = vset.pattern.permute.xlu0 0
        %855 = vperm.xlu0 %854, %v850
        %v856 = vpop.permute.xlu0 %855
        %858 = vset.pattern.permute.xlu0 0
        %859 = vperm.xlu0 %858, %v851
        %v860 = vpop.permute.xlu0 %859
        %862 = vset.pattern.permute.xlu0 0
        %863 = vperm.xlu0 %862, %v852
        %v864 = vpop.permute.xlu0 %863
        %866 = vset.pattern.permute.xlu0 0
        %867 = vperm.xlu0 %866, %v853
        %v868 = vpop.permute.xlu0 %867
        %v870 = vadd.f32 %v838, %v856
        %v871 = vadd.f32 %v839, %v856
        %v872 = vadd.f32 %v840, %v860
        %v873 = vadd.f32 %v841, %v860
        %v874 = vadd.f32 %v842, %v864
        %v875 = vadd.f32 %v843, %v864
        %v876 = vadd.f32 %v844, %v868
        %v877 = vadd.f32 %v845, %v868
        %v878 = vmax.f32 %v870, 0.0
        %v879 = vmax.f32 %v871, 0.0
        %v880 = vmax.f32 %v872, 0.0
        %v881 = vmax.f32 %v873, 0.0
        %v882 = vmax.f32 %v874, 0.0
        %v883 = vmax.f32 %v875, 0.0
        %v884 = vmax.f32 %v876, 0.0
        %v885 = vmax.f32 %v877, 0.0
        %v886 = vpack.c.bf16 %v878, %v878
        %v887 = vpack.c.bf16 %v880, %v880
        %v888 = vpack.c.bf16 %v882, %v882
        %v889 = vpack.c.bf16 %v884, %v884
        %v894 = vrot.slane %v886, 2
        %v895 = vrot.slane %v887, 2
        %v896 = vrot.slane %v888, 2
        %v897 = vrot.slane %v889, 2
        %vm898 = vcmask 1041408
        %v901 = vsel %vm898, %v886, %v894
        %v904 = vsel %vm898, %v887, %v895
        %v907 = vsel %vm898, %v888, %v896
        %v910 = vsel %vm898, %v889, %v897
        %911 = vst [vmem:[#allocation1] ss:$2 sm:$0xff] %v901
        %v912 = vld.sshfl [vmem:[#allocation1] sm:$0xff pattern:$0x75643120]
        %s914 = scalar_lea.vmem [#allocation1], 16
        %915 = vst [vmem:[%s914] ss:$2 sm:$0xff] %v904
        %v916 = vld.sshfl [vmem:[#allocation1 + $0x10] sm:$0xff pattern:$0x75643120]
        %s918 = scalar_lea.vmem [#allocation1], 32
        %919 = vst [vmem:[%s918] ss:$2 sm:$0xff] %v907
        %v920 = vld.sshfl [vmem:[#allocation1 + $0x20] sm:$0xff pattern:$0x75643120]
        %s922 = scalar_lea.vmem [#allocation1], 48
        %923 = vst [vmem:[%s922] ss:$2 sm:$0xff] %v910
        %v924 = vld.sshfl [vmem:[#allocation1 + $0x30] sm:$0xff pattern:$0x75643120]
        %v926 = vunpack.c.l.b16 %v912
        %v927 = vunpack.c.l.b16 %v916
        %v928 = vunpack.c.l.b16 %v920
        %v929 = vunpack.c.l.b16 %v924
        %v930 = vrot.slane %v927, 7
        %vm931 = vcmask 1041409
        %v932 = vsel %vm931, %v930, %v926
        %v933 = vrot.slane %v928, 6
        %vm934 = vcmask 1042434
        %v935 = vsel %vm934, %v933, %v932
        %v936 = vrot.slane %v929, 5
        %vm937 = vcmask 1043459
        %v938 = vsel %vm937, %v936, %v935
        %v939 = vpack.c.b16 %v938, %v938
        %v940 = vrot.slane %v939, 2
        %v943 = vsel %vm898, %v939, %v940
        %vm945 = vcmask 123904
        %946 = vst.msk [vmem:[#allocation3] sm:$0x3] %vm945, %v943
        %947 = vst [vmem:[#allocation1] ss:$2 sm:$0xff] %v901
        %v948 = vld.sshfl [vmem:[#allocation1] sm:$0xff pattern:$0x75643120]
        %s950 = scalar_lea.vmem [#allocation1], 16
        %951 = vst [vmem:[%s950] ss:$2 sm:$0xff] %v904
        %v952 = vld.sshfl [vmem:[#allocation1 + $0x10] sm:$0xff pattern:$0x75643120]
        %s954 = scalar_lea.vmem [#allocation1], 32
        %955 = vst [vmem:[%s954] ss:$2 sm:$0xff] %v907
        %v956 = vld.sshfl [vmem:[#allocation1 + $0x20] sm:$0xff pattern:$0x75643120]
        %s958 = scalar_lea.vmem [#allocation1], 48
        %959 = vst [vmem:[%s958] ss:$2 sm:$0xff] %v910
        %v960 = vld.sshfl [vmem:[#allocation1 + $0x30] sm:$0xff pattern:$0x75643120]
        %v962 = vunpack.c.l.b16 %v948
        %v963 = vunpack.c.l.b16 %v952
        %v964 = vunpack.c.l.b16 %v956
        %v965 = vunpack.c.l.b16 %v960
        %v966 = vrot.slane %v962, 1
        %v967 = vsel %vm931, %v963, %v966
        %v968 = vrot.slane %v964, 7
        %v969 = vsel %vm934, %v968, %v967
        %v970 = vrot.slane %v965, 6
        %v971 = vsel %vm937, %v970, %v969
        %v972 = vpack.c.b16 %v971, %v971
        %v973 = vrot.slane %v972, 2
        %v976 = vsel %vm898, %v972, %v973
        %978 = vrot.lane.b32.xlu0 %v976, 16
        %v979 = vpop.permute.xlu0 %978
        %vm981 = vcmask 255104
        %982 = vst.msk [vmem:[#allocation3] sm:$0x3] %vm981, %v979
        %983 = vst [vmem:[#allocation1] ss:$2 sm:$0xff] %v901
        %v984 = vld.sshfl [vmem:[#allocation1] sm:$0xff pattern:$0x75643120]
        %s986 = scalar_lea.vmem [#allocation1], 16
        %987 = vst [vmem:[%s986] ss:$2 sm:$0xff] %v904
        %v988 = vld.sshfl [vmem:[#allocation1 + $0x10] sm:$0xff pattern:$0x75643120]
        %s990 = scalar_lea.vmem [#allocation1], 32
        %991 = vst [vmem:[%s990] ss:$2 sm:$0xff] %v907
        %v992 = vld.sshfl [vmem:[#allocation1 + $0x20] sm:$0xff pattern:$0x75643120]
        %s994 = scalar_lea.vmem [#allocation1], 48
        %995 = vst [vmem:[%s994] ss:$2 sm:$0xff] %v910
        %v996 = vld.sshfl [vmem:[#allocation1 + $0x30] sm:$0xff pattern:$0x75643120]
        %v998 = vunpack.c.l.b16 %v984
        %v999 = vunpack.c.l.b16 %v988
        %v1000 = vunpack.c.l.b16 %v992
        %v1001 = vunpack.c.l.b16 %v996
        %v1002 = vrot.slane %v998, 2
        %v1003 = vrot.slane %v999, 1
        %v1004 = vsel %vm931, %v1003, %v1002
        %v1005 = vsel %vm934, %v1000, %v1004
        %v1006 = vrot.slane %v1001, 7
        %v1007 = vsel %vm937, %v1006, %v1005
        %v1008 = vpack.c.b16 %v1007, %v1007
        %v1009 = vrot.slane %v1008, 2
        %v1012 = vsel %vm898, %v1008, %v1009
        %1014 = vrot.lane.b32.xlu0 %v1012, 32
        %v1015 = vpop.permute.xlu0 %1014
        %vm1017 = vcmask 386304
        %1018 = vst.msk [vmem:[#allocation3] sm:$0x3] %vm1017, %v1015
        %1019 = vst [vmem:[#allocation1] ss:$2 sm:$0xff] %v901
        %v1020 = vld.sshfl [vmem:[#allocation1] sm:$0xff pattern:$0x75643120]
        %s1022 = scalar_lea.vmem [#allocation1], 16
        %1023 = vst [vmem:[%s1022] ss:$2 sm:$0xff] %v904
        %v1024 = vld.sshfl [vmem:[#allocation1 + $0x10] sm:$0xff pattern:$0x75643120]
        %s1026 = scalar_lea.vmem [#allocation1], 32
        %1027 = vst [vmem:[%s1026] ss:$2 sm:$0xff] %v907
        %v1028 = vld.sshfl [vmem:[#allocation1 + $0x20] sm:$0xff pattern:$0x75643120]
        %s1030 = scalar_lea.vmem [#allocation1], 48
        %1031 = vst [vmem:[%s1030] ss:$2 sm:$0xff] %v910
        %v1032 = vld.sshfl [vmem:[#allocation1 + $0x30] sm:$0xff pattern:$0x75643120]
        %v1034 = vunpack.c.l.b16 %v1020
        %v1035 = vunpack.c.l.b16 %v1024
        %v1036 = vunpack.c.l.b16 %v1028
        %v1037 = vunpack.c.l.b16 %v1032
        %v1038 = vrot.slane %v1034, 3
        %v1039 = vrot.slane %v1035, 2
        %v1040 = vsel %vm931, %v1039, %v1038
        %v1041 = vrot.slane %v1036, 1
        %v1042 = vsel %vm934, %v1041, %v1040
        %v1043 = vsel %vm937, %v1037, %v1042
        %v1044 = vpack.c.b16 %v1043, %v1043
        %v1045 = vrot.slane %v1044, 2
        %v1048 = vsel %vm898, %v1044, %v1045
        %1050 = vrot.lane.b32.xlu0 %v1048, 48
        %v1051 = vpop.permute.xlu0 %1050
        %vm1053 = vcmask 517504
        %1054 = vst.msk [vmem:[#allocation3] sm:$0x3] %vm1053, %v1051
        %1055 = vst.sshfl [vmem:[#allocation1] sm:$0xff pattern:$0x75643120] %v886
        %s1056 = scalar_lea.vmem [#allocation1], 1
        %v1057 = vld [vmem:[%s1056] ss:$2 sm:$0xff]
        %1058 = vst.sshfl [vmem:[#allocation1 + $0x10] sm:$0xff pattern:$0x75643120] %v887
        %s1059 = scalar_lea.vmem [#allocation1], 17
        %v1060 = vld [vmem:[%s1059] ss:$2 sm:$0xff]
        %1061 = vst.sshfl [vmem:[#allocation1 + $0x20] sm:$0xff pattern:$0x75643120] %v888
        %s1062 = scalar_lea.vmem [#allocation1], 33
        %v1063 = vld [vmem:[%s1062] ss:$2 sm:$0xff]
        %1064 = vst.sshfl [vmem:[#allocation1 + $0x30] sm:$0xff pattern:$0x75643120] %v889
        %s1065 = scalar_lea.vmem [#allocation1], 49
        %v1066 = vld [vmem:[%s1065] ss:$2 sm:$0xff]
        %1067 = vst [vmem:[#allocation1] ss:$2 sm:$0xff] %v1057
        %v1068 = vld.sshfl [vmem:[#allocation1] sm:$0xff pattern:$0x75643120]
        %s1070 = scalar_lea.vmem [#allocation1], 16
        %1071 = vst [vmem:[%s1070] ss:$2 sm:$0xff] %v1060
        %v1072 = vld.sshfl [vmem:[#allocation1 + $0x10] sm:$0xff pattern:$0x75643120]
        %s1074 = scalar_lea.vmem [#allocation1], 32
        %1075 = vst [vmem:[%s1074] ss:$2 sm:$0xff] %v1063
        %v1076 = vld.sshfl [vmem:[#allocation1 + $0x20] sm:$0xff pattern:$0x75643120]
        %s1078 = scalar_lea.vmem [#allocation1], 48
        %1079 = vst [vmem:[%s1078] ss:$2 sm:$0xff] %v1066
        %v1080 = vld.sshfl [vmem:[#allocation1 + $0x30] sm:$0xff pattern:$0x75643120]
        %v1082 = vunpack.c.l.b16 %v1068
        %v1083 = vunpack.c.l.b16 %v1072
        %v1084 = vunpack.c.l.b16 %v1076
        %v1085 = vunpack.c.l.b16 %v1080
        %v1086 = vrot.slane %v1083, 7
        %v1087 = vsel %vm931, %v1086, %v1082
        %v1088 = vrot.slane %v1084, 6
        %v1089 = vsel %vm934, %v1088, %v1087
        %v1090 = vrot.slane %v1085, 5
        %v1091 = vsel %vm937, %v1090, %v1089
        %v1092 = vpack.c.b16 %v1091, %v1091
        %v1093 = vrot.slane %v1092, 2
        %v1096 = vsel %vm898, %v1092, %v1093
        %1098 = vrot.lane.b32.xlu0 %v1096, 64
        %v1099 = vpop.permute.xlu0 %1098
        %vm1101 = vcmask 648704
        %1102 = vst.msk [vmem:[#allocation3] sm:$0x3] %vm1101, %v1099
        %1103 = vst.sshfl [vmem:[#allocation1] sm:$0xff pattern:$0x75643120] %v886
        %s1104 = scalar_lea.vmem [#allocation1], 1
        %v1105 = vld [vmem:[%s1104] ss:$2 sm:$0xff]
        %1106 = vst.sshfl [vmem:[#allocation1 + $0x10] sm:$0xff pattern:$0x75643120] %v887
        %s1107 = scalar_lea.vmem [#allocation1], 17
        %v1108 = vld [vmem:[%s1107] ss:$2 sm:$0xff]
        %1109 = vst.sshfl [vmem:[#allocation1 + $0x20] sm:$0xff pattern:$0x75643120] %v888
        %s1110 = scalar_lea.vmem [#allocation1], 33
        %v1111 = vld [vmem:[%s1110] ss:$2 sm:$0xff]
        %1112 = vst.sshfl [vmem:[#allocation1 + $0x30] sm:$0xff pattern:$0x75643120] %v889
        %s1113 = scalar_lea.vmem [#allocation1], 49
        %v1114 = vld [vmem:[%s1113] ss:$2 sm:$0xff]
        %1115 = vst [vmem:[#allocation1] ss:$2 sm:$0xff] %v1105
        %v1116 = vld.sshfl [vmem:[#allocation1] sm:$0xff pattern:$0x75643120]
        %s1118 = scalar_lea.vmem [#allocation1], 16
        %1119 = vst [vmem:[%s1118] ss:$2 sm:$0xff] %v1108
        %v1120 = vld.sshfl [vmem:[#allocation1 + $0x10] sm:$0xff pattern:$0x75643120]
        %s1122 = scalar_lea.vmem [#allocation1], 32
        %1123 = vst [vmem:[%s1122] ss:$2 sm:$0xff] %v1111
        %v1124 = vld.sshfl [vmem:[#allocation1 + $0x20] sm:$0xff pattern:$0x75643120]
        %s1126 = scalar_lea.vmem [#allocation1], 48
        %1127 = vst [vmem:[%s1126] ss:$2 sm:$0xff] %v1114
        %v1128 = vld.sshfl [vmem:[#allocation1 + $0x30] sm:$0xff pattern:$0x75643120]
        %v1130 = vunpack.c.l.b16 %v1116
        %v1131 = vunpack.c.l.b16 %v1120
        %v1132 = vunpack.c.l.b16 %v1124
        %v1133 = vunpack.c.l.b16 %v1128
        %v1134 = vrot.slane %v1130, 1
        %v1135 = vsel %vm931, %v1131, %v1134
        %v1136 = vrot.slane %v1132, 7
        %v1137 = vsel %vm934, %v1136, %v1135
        %v1138 = vrot.slane %v1133, 6
        %v1139 = vsel %vm937, %v1138, %v1137
        %v1140 = vpack.c.b16 %v1139, %v1139
        %v1141 = vrot.slane %v1140, 2
        %v1144 = vsel %vm898, %v1140, %v1141
        %1146 = vrot.lane.b32.xlu0 %v1144, 80
        %v1147 = vpop.permute.xlu0 %1146
        %vm1149 = vcmask 779904
        %1150 = vst.msk [vmem:[#allocation3] sm:$0x3] %vm1149, %v1147
        %1151 = vst.sshfl [vmem:[#allocation1] sm:$0xff pattern:$0x75643120] %v886
        %s1152 = scalar_lea.vmem [#allocation1], 1
        %v1153 = vld [vmem:[%s1152] ss:$2 sm:$0xff]
        %1154 = vst.sshfl [vmem:[#allocation1 + $0x10] sm:$0xff pattern:$0x75643120] %v887
        %s1155 = scalar_lea.vmem [#allocation1], 17
        %v1156 = vld [vmem:[%s1155] ss:$2 sm:$0xff]
        %1157 = vst.sshfl [vmem:[#allocation1 + $0x20] sm:$0xff pattern:$0x75643120] %v888
        %s1158 = scalar_lea.vmem [#allocation1], 33
        %v1159 = vld [vmem:[%s1158] ss:$2 sm:$0xff]
        %1160 = vst.sshfl [vmem:[#allocation1 + $0x30] sm:$0xff pattern:$0x75643120] %v889
        %s1161 = scalar_lea.vmem [#allocation1], 49
        %v1162 = vld [vmem:[%s1161] ss:$2 sm:$0xff]
        %1163 = vst [vmem:[#allocation1] ss:$2 sm:$0xff] %v1153
        %v1164 = vld.sshfl [vmem:[#allocation1] sm:$0xff pattern:$0x75643120]
        %s1166 = scalar_lea.vmem [#allocation1], 16
        %1167 = vst [vmem:[%s1166] ss:$2 sm:$0xff] %v1156
        %v1168 = vld.sshfl [vmem:[#allocation1 + $0x10] sm:$0xff pattern:$0x75643120]
        %s1170 = scalar_lea.vmem [#allocation1], 32
        %1171 = vst [vmem:[%s1170] ss:$2 sm:$0xff] %v1159
        %v1172 = vld.sshfl [vmem:[#allocation1 + $0x20] sm:$0xff pattern:$0x75643120]
        %s1174 = scalar_lea.vmem [#allocation1], 48
        %1175 = vst [vmem:[%s1174] ss:$2 sm:$0xff] %v1162
        %v1176 = vld.sshfl [vmem:[#allocation1 + $0x30] sm:$0xff pattern:$0x75643120]
        %v1178 = vunpack.c.l.b16 %v1164
        %v1179 = vunpack.c.l.b16 %v1168
        %v1180 = vunpack.c.l.b16 %v1172
        %v1181 = vunpack.c.l.b16 %v1176
        %v1182 = vrot.slane %v1178, 2
        %v1183 = vrot.slane %v1179, 1
        %v1184 = vsel %vm931, %v1183, %v1182
        %v1185 = vsel %vm934, %v1180, %v1184
        %v1186 = vrot.slane %v1181, 7
        %v1187 = vsel %vm937, %v1186, %v1185
        %v1188 = vpack.c.b16 %v1187, %v1187
        %v1189 = vrot.slane %v1188, 2
        %v1192 = vsel %vm898, %v1188, %v1189
        %1194 = vrot.lane.b32.xlu0 %v1192, 96
        %v1195 = vpop.permute.xlu0 %1194
        %vm1197 = vcmask 911104
        %1198 = vst.msk [vmem:[#allocation3] sm:$0x3] %vm1197, %v1195
        %1199 = vst.sshfl [vmem:[#allocation1] sm:$0xff pattern:$0x75643120] %v886
        %s1200 = scalar_lea.vmem [#allocation1], 1
        %v1201 = vld [vmem:[%s1200] ss:$2 sm:$0xff]
        %1202 = vst.sshfl [vmem:[#allocation1 + $0x10] sm:$0xff pattern:$0x75643120] %v887
        %s1203 = scalar_lea.vmem [#allocation1], 17
        %v1204 = vld [vmem:[%s1203] ss:$2 sm:$0xff]
        %1205 = vst.sshfl [vmem:[#allocation1 + $0x20] sm:$0xff pattern:$0x75643120] %v888
        %s1206 = scalar_lea.vmem [#allocation1], 33
        %v1207 = vld [vmem:[%s1206] ss:$2 sm:$0xff]
        %1208 = vst.sshfl [vmem:[#allocation1 + $0x30] sm:$0xff pattern:$0x75643120] %v889
        %s1209 = scalar_lea.vmem [#allocation1], 49
        %v1210 = vld [vmem:[%s1209] ss:$2 sm:$0xff]
        %1211 = vst [vmem:[#allocation1] ss:$2 sm:$0xff] %v1201
        %v1212 = vld.sshfl [vmem:[#allocation1] sm:$0xff pattern:$0x75643120]
        %s1214 = scalar_lea.vmem [#allocation1], 16
        %1215 = vst [vmem:[%s1214] ss:$2 sm:$0xff] %v1204
        %v1216 = vld.sshfl [vmem:[#allocation1 + $0x10] sm:$0xff pattern:$0x75643120]
        %s1218 = scalar_lea.vmem [#allocation1], 32
        %1219 = vst [vmem:[%s1218] ss:$2 sm:$0xff] %v1207
        %v1220 = vld.sshfl [vmem:[#allocation1 + $0x20] sm:$0xff pattern:$0x75643120]
        %s1222 = scalar_lea.vmem [#allocation1], 48
        %1223 = vst [vmem:[%s1222] ss:$2 sm:$0xff] %v1210
        %v1224 = vld.sshfl [vmem:[#allocation1 + $0x30] sm:$0xff pattern:$0x75643120]
        %v1226 = vunpack.c.l.b16 %v1212
        %v1227 = vunpack.c.l.b16 %v1216
        %v1228 = vunpack.c.l.b16 %v1220
        %v1229 = vunpack.c.l.b16 %v1224
        %v1230 = vrot.slane %v1226, 3
        %v1231 = vrot.slane %v1227, 2
        %v1232 = vsel %vm931, %v1231, %v1230
        %v1233 = vrot.slane %v1228, 1
        %v1234 = vsel %vm934, %v1233, %v1232
        %v1235 = vsel %vm937, %v1229, %v1234
        %v1236 = vpack.c.b16 %v1235, %v1235
        %v1237 = vrot.slane %v1236, 2
        %v1240 = vsel %vm898, %v1236, %v1237
        %1242 = vrot.lane.b32.xlu0 %v1240, 112
        %v1243 = vpop.permute.xlu0 %1242
        %vm1245 = vcmask 1042304
        %1246 = vst.msk [vmem:[#allocation3] sm:$0x3] %vm1245, %v1243
        %v1247 = vpack.c.bf16 %v879, %v879
        %v1248 = vpack.c.bf16 %v881, %v881
        %v1249 = vpack.c.bf16 %v883, %v883
        %v1250 = vpack.c.bf16 %v885, %v885
        %v1255 = vrot.slane %v1247, 2
        %v1256 = vrot.slane %v1248, 2
        %v1257 = vrot.slane %v1249, 2
        %v1258 = vrot.slane %v1250, 2
        %v1261 = vsel %vm898, %v1247, %v1255
        %v1264 = vsel %vm898, %v1248, %v1256
        %v1267 = vsel %vm898, %v1249, %v1257
        %v1270 = vsel %vm898, %v1250, %v1258
        %1271 = vst [vmem:[#allocation1] ss:$2 sm:$0xff] %v1261
        %v1272 = vld.sshfl [vmem:[#allocation1] sm:$0xff pattern:$0x75643120]
        %s1274 = scalar_lea.vmem [#allocation1], 16
        %1275 = vst [vmem:[%s1274] ss:$2 sm:$0xff] %v1264
        %v1276 = vld.sshfl [vmem:[#allocation1 + $0x10] sm:$0xff pattern:$0x75643120]
        %s1278 = scalar_lea.vmem [#allocation1], 32
        %1279 = vst [vmem:[%s1278] ss:$2 sm:$0xff] %v1267
        %v1280 = vld.sshfl [vmem:[#allocation1 + $0x20] sm:$0xff pattern:$0x75643120]
        %s1282 = scalar_lea.vmem [#allocation1], 48
        %1283 = vst [vmem:[%s1282] ss:$2 sm:$0xff] %v1270
        %v1284 = vld.sshfl [vmem:[#allocation1 + $0x30] sm:$0xff pattern:$0x75643120]
        %v1286 = vunpack.c.l.b16 %v1272
        %v1287 = vunpack.c.l.b16 %v1276
        %v1288 = vunpack.c.l.b16 %v1280
        %v1289 = vunpack.c.l.b16 %v1284
        %v1290 = vrot.slane %v1287, 7
        %v1291 = vsel %vm931, %v1290, %v1286
        %v1292 = vrot.slane %v1288, 6
        %v1293 = vsel %vm934, %v1292, %v1291
        %v1294 = vrot.slane %v1289, 5
        %v1295 = vsel %vm937, %v1294, %v1293
        %v1296 = vpack.c.b16 %v1295, %v1295
        %v1297 = vrot.slane %v1296, 2
        %v1300 = vsel %vm898, %v1296, %v1297
        %1302 = vst.msk [vmem:[#allocation3 + $0x2] sm:$0x3] %vm945, %v1300
        %1303 = vst [vmem:[#allocation1] ss:$2 sm:$0xff] %v1261
        %v1304 = vld.sshfl [vmem:[#allocation1] sm:$0xff pattern:$0x75643120]
        %s1306 = scalar_lea.vmem [#allocation1], 16
        %1307 = vst [vmem:[%s1306] ss:$2 sm:$0xff] %v1264
        %v1308 = vld.sshfl [vmem:[#allocation1 + $0x10] sm:$0xff pattern:$0x75643120]
        %s1310 = scalar_lea.vmem [#allocation1], 32
        %1311 = vst [vmem:[%s1310] ss:$2 sm:$0xff] %v1267
        %v1312 = vld.sshfl [vmem:[#allocation1 + $0x20] sm:$0xff pattern:$0x75643120]
        %s1314 = scalar_lea.vmem [#allocation1], 48
        %1315 = vst [vmem:[%s1314] ss:$2 sm:$0xff] %v1270
        %v1316 = vld.sshfl [vmem:[#allocation1 + $0x30] sm:$0xff pattern:$0x75643120]
        %v1318 = vunpack.c.l.b16 %v1304
        %v1319 = vunpack.c.l.b16 %v1308
        %v1320 = vunpack.c.l.b16 %v1312
        %v1321 = vunpack.c.l.b16 %v1316
        %v1322 = vrot.slane %v1318, 1
        %v1323 = vsel %vm931, %v1319, %v1322
        %v1324 = vrot.slane %v1320, 7
        %v1325 = vsel %vm934, %v1324, %v1323
        %v1326 = vrot.slane %v1321, 6
        %v1327 = vsel %vm937, %v1326, %v1325
        %v1328 = vpack.c.b16 %v1327, %v1327
        %v1329 = vrot.slane %v1328, 2
        %v1332 = vsel %vm898, %v1328, %v1329
        %1334 = vrot.lane.b32.xlu0 %v1332, 16
        %v1335 = vpop.permute.xlu0 %1334
        %1337 = vst.msk [vmem:[#allocation3 + $0x2] sm:$0x3] %vm981, %v1335
        %1338 = vst [vmem:[#allocation1] ss:$2 sm:$0xff] %v1261
        %v1339 = vld.sshfl [vmem:[#allocation1] sm:$0xff pattern:$0x75643120]
        %s1341 = scalar_lea.vmem [#allocation1], 16
        %1342 = vst [vmem:[%s1341] ss:$2 sm:$0xff] %v1264
        %v1343 = vld.sshfl [vmem:[#allocation1 + $0x10] sm:$0xff pattern:$0x75643120]
        %s1345 = scalar_lea.vmem [#allocation1], 32
        %1346 = vst [vmem:[%s1345] ss:$2 sm:$0xff] %v1267
        %v1347 = vld.sshfl [vmem:[#allocation1 + $0x20] sm:$0xff pattern:$0x75643120]
        %s1349 = scalar_lea.vmem [#allocation1], 48
        %1350 = vst [vmem:[%s1349] ss:$2 sm:$0xff] %v1270
        %v1351 = vld.sshfl [vmem:[#allocation1 + $0x30] sm:$0xff pattern:$0x75643120]
        %v1353 = vunpack.c.l.b16 %v1339
        %v1354 = vunpack.c.l.b16 %v1343
        %v1355 = vunpack.c.l.b16 %v1347
        %v1356 = vunpack.c.l.b16 %v1351
        %v1357 = vrot.slane %v1353, 2
        %v1358 = vrot.slane %v1354, 1
        %v1359 = vsel %vm931, %v1358, %v1357
        %v1360 = vsel %vm934, %v1355, %v1359
        %v1361 = vrot.slane %v1356, 7
        %v1362 = vsel %vm937, %v1361, %v1360
        %v1363 = vpack.c.b16 %v1362, %v1362
        %v1364 = vrot.slane %v1363, 2
        %v1367 = vsel %vm898, %v1363, %v1364
        %1369 = vrot.lane.b32.xlu0 %v1367, 32
        %v1370 = vpop.permute.xlu0 %1369
        %1372 = vst.msk [vmem:[#allocation3 + $0x2] sm:$0x3] %vm1017, %v1370
        %1373 = vst [vmem:[#allocation1] ss:$2 sm:$0xff] %v1261
        %v1374 = vld.sshfl [vmem:[#allocation1] sm:$0xff pattern:$0x75643120]
        %s1376 = scalar_lea.vmem [#allocation1], 16
        %1377 = vst [vmem:[%s1376] ss:$2 sm:$0xff] %v1264
        %v1378 = vld.sshfl [vmem:[#allocation1 + $0x10] sm:$0xff pattern:$0x75643120]
        %s1380 = scalar_lea.vmem [#allocation1], 32
        %1381 = vst [vmem:[%s1380] ss:$2 sm:$0xff] %v1267
        %v1382 = vld.sshfl [vmem:[#allocation1 + $0x20] sm:$0xff pattern:$0x75643120]
        %s1384 = scalar_lea.vmem [#allocation1], 48
        %1385 = vst [vmem:[%s1384] ss:$2 sm:$0xff] %v1270
        %v1386 = vld.sshfl [vmem:[#allocation1 + $0x30] sm:$0xff pattern:$0x75643120]
        %v1388 = vunpack.c.l.b16 %v1374
        %v1389 = vunpack.c.l.b16 %v1378
        %v1390 = vunpack.c.l.b16 %v1382
        %v1391 = vunpack.c.l.b16 %v1386
        %v1392 = vrot.slane %v1388, 3
        %v1393 = vrot.slane %v1389, 2
        %v1394 = vsel %vm931, %v1393, %v1392
        %v1395 = vrot.slane %v1390, 1
        %v1396 = vsel %vm934, %v1395, %v1394
        %v1397 = vsel %vm937, %v1391, %v1396
        %v1398 = vpack.c.b16 %v1397, %v1397
        %v1399 = vrot.slane %v1398, 2
        %v1402 = vsel %vm898, %v1398, %v1399
        %1404 = vrot.lane.b32.xlu0 %v1402, 48
        %v1405 = vpop.permute.xlu0 %1404
        %1407 = vst.msk [vmem:[#allocation3 + $0x2] sm:$0x3] %vm1053, %v1405
        %1408 = vst.sshfl [vmem:[#allocation1] sm:$0xff pattern:$0x75643120] %v1247
        %s1409 = scalar_lea.vmem [#allocation1], 1
        %v1410 = vld [vmem:[%s1409] ss:$2 sm:$0xff]
        %1411 = vst.sshfl [vmem:[#allocation1 + $0x10] sm:$0xff pattern:$0x75643120] %v1248
        %s1412 = scalar_lea.vmem [#allocation1], 17
        %v1413 = vld [vmem:[%s1412] ss:$2 sm:$0xff]
        %1414 = vst.sshfl [vmem:[#allocation1 + $0x20] sm:$0xff pattern:$0x75643120] %v1249
        %s1415 = scalar_lea.vmem [#allocation1], 33
        %v1416 = vld [vmem:[%s1415] ss:$2 sm:$0xff]
        %1417 = vst.sshfl [vmem:[#allocation1 + $0x30] sm:$0xff pattern:$0x75643120] %v1250
        %s1418 = scalar_lea.vmem [#allocation1], 49
        %v1419 = vld [vmem:[%s1418] ss:$2 sm:$0xff]
        %1420 = vst [vmem:[#allocation1] ss:$2 sm:$0xff] %v1410
        %v1421 = vld.sshfl [vmem:[#allocation1] sm:$0xff pattern:$0x75643120]
        %s1423 = scalar_lea.vmem [#allocation1], 16
        %1424 = vst [vmem:[%s1423] ss:$2 sm:$0xff] %v1413
        %v1425 = vld.sshfl [vmem:[#allocation1 + $0x10] sm:$0xff pattern:$0x75643120]
        %s1427 = scalar_lea.vmem [#allocation1], 32
        %1428 = vst [vmem:[%s1427] ss:$2 sm:$0xff] %v1416
        %v1429 = vld.sshfl [vmem:[#allocation1 + $0x20] sm:$0xff pattern:$0x75643120]
        %s1431 = scalar_lea.vmem [#allocation1], 48
        %1432 = vst [vmem:[%s1431] ss:$2 sm:$0xff] %v1419
        %v1433 = vld.sshfl [vmem:[#allocation1 + $0x30] sm:$0xff pattern:$0x75643120]
        %v1435 = vunpack.c.l.b16 %v1421
        %v1436 = vunpack.c.l.b16 %v1425
        %v1437 = vunpack.c.l.b16 %v1429
        %v1438 = vunpack.c.l.b16 %v1433
        %v1439 = vrot.slane %v1436, 7
        %v1440 = vsel %vm931, %v1439, %v1435
        %v1441 = vrot.slane %v1437, 6
        %v1442 = vsel %vm934, %v1441, %v1440
        %v1443 = vrot.slane %v1438, 5
        %v1444 = vsel %vm937, %v1443, %v1442
        %v1445 = vpack.c.b16 %v1444, %v1444
        %v1446 = vrot.slane %v1445, 2
        %v1449 = vsel %vm898, %v1445, %v1446
        %1451 = vrot.lane.b32.xlu0 %v1449, 64
        %v1452 = vpop.permute.xlu0 %1451
        %1454 = vst.msk [vmem:[#allocation3 + $0x2] sm:$0x3] %vm1101, %v1452
        %1455 = vst.sshfl [vmem:[#allocation1] sm:$0xff pattern:$0x75643120] %v1247
        %s1456 = scalar_lea.vmem [#allocation1], 1
        %v1457 = vld [vmem:[%s1456] ss:$2 sm:$0xff]
        %1458 = vst.sshfl [vmem:[#allocation1 + $0x10] sm:$0xff pattern:$0x75643120] %v1248
        %s1459 = scalar_lea.vmem [#allocation1], 17
        %v1460 = vld [vmem:[%s1459] ss:$2 sm:$0xff]
        %1461 = vst.sshfl [vmem:[#allocation1 + $0x20] sm:$0xff pattern:$0x75643120] %v1249
        %s1462 = scalar_lea.vmem [#allocation1], 33
        %v1463 = vld [vmem:[%s1462] ss:$2 sm:$0xff]
        %1464 = vst.sshfl [vmem:[#allocation1 + $0x30] sm:$0xff pattern:$0x75643120] %v1250
        %s1465 = scalar_lea.vmem [#allocation1], 49
        %v1466 = vld [vmem:[%s1465] ss:$2 sm:$0xff]
        %1467 = vst [vmem:[#allocation1] ss:$2 sm:$0xff] %v1457
        %v1468 = vld.sshfl [vmem:[#allocation1] sm:$0xff pattern:$0x75643120]
        %s1470 = scalar_lea.vmem [#allocation1], 16
        %1471 = vst [vmem:[%s1470] ss:$2 sm:$0xff] %v1460
        %v1472 = vld.sshfl [vmem:[#allocation1 + $0x10] sm:$0xff pattern:$0x75643120]
        %s1474 = scalar_lea.vmem [#allocation1], 32
        %1475 = vst [vmem:[%s1474] ss:$2 sm:$0xff] %v1463
        %v1476 = vld.sshfl [vmem:[#allocation1 + $0x20] sm:$0xff pattern:$0x75643120]
        %s1478 = scalar_lea.vmem [#allocation1], 48
        %1479 = vst [vmem:[%s1478] ss:$2 sm:$0xff] %v1466
        %v1480 = vld.sshfl [vmem:[#allocation1 + $0x30] sm:$0xff pattern:$0x75643120]
        %v1482 = vunpack.c.l.b16 %v1468
        %v1483 = vunpack.c.l.b16 %v1472
        %v1484 = vunpack.c.l.b16 %v1476
        %v1485 = vunpack.c.l.b16 %v1480
        %v1486 = vrot.slane %v1482, 1
        %v1487 = vsel %vm931, %v1483, %v1486
        %v1488 = vrot.slane %v1484, 7
        %v1489 = vsel %vm934, %v1488, %v1487
        %v1490 = vrot.slane %v1485, 6
        %v1491 = vsel %vm937, %v1490, %v1489
        %v1492 = vpack.c.b16 %v1491, %v1491
        %v1493 = vrot.slane %v1492, 2
        %v1496 = vsel %vm898, %v1492, %v1493
        %1498 = vrot.lane.b32.xlu0 %v1496, 80
        %v1499 = vpop.permute.xlu0 %1498
        %1501 = vst.msk [vmem:[#allocation3 + $0x2] sm:$0x3] %vm1149, %v1499
        %1502 = vst.sshfl [vmem:[#allocation1] sm:$0xff pattern:$0x75643120] %v1247
        %s1503 = scalar_lea.vmem [#allocation1], 1
        %v1504 = vld [vmem:[%s1503] ss:$2 sm:$0xff]
        %1505 = vst.sshfl [vmem:[#allocation1 + $0x10] sm:$0xff pattern:$0x75643120] %v1248
        %s1506 = scalar_lea.vmem [#allocation1], 17
        %v1507 = vld [vmem:[%s1506] ss:$2 sm:$0xff]
        %1508 = vst.sshfl [vmem:[#allocation1 + $0x20] sm:$0xff pattern:$0x75643120] %v1249
        %s1509 = scalar_lea.vmem [#allocation1], 33
        %v1510 = vld [vmem:[%s1509] ss:$2 sm:$0xff]
        %1511 = vst.sshfl [vmem:[#allocation1 + $0x30] sm:$0xff pattern:$0x75643120] %v1250
        %s1512 = scalar_lea.vmem [#allocation1], 49
        %v1513 = vld [vmem:[%s1512] ss:$2 sm:$0xff]
        %1514 = vst [vmem:[#allocation1] ss:$2 sm:$0xff] %v1504
        %v1515 = vld.sshfl [vmem:[#allocation1] sm:$0xff pattern:$0x75643120]
        %s1517 = scalar_lea.vmem [#allocation1], 16
        %1518 = vst [vmem:[%s1517] ss:$2 sm:$0xff] %v1507
        %v1519 = vld.sshfl [vmem:[#allocation1 + $0x10] sm:$0xff pattern:$0x75643120]
        %s1521 = scalar_lea.vmem [#allocation1], 32
        %1522 = vst [vmem:[%s1521] ss:$2 sm:$0xff] %v1510
        %v1523 = vld.sshfl [vmem:[#allocation1 + $0x20] sm:$0xff pattern:$0x75643120]
        %s1525 = scalar_lea.vmem [#allocation1], 48
        %1526 = vst [vmem:[%s1525] ss:$2 sm:$0xff] %v1513
        %v1527 = vld.sshfl [vmem:[#allocation1 + $0x30] sm:$0xff pattern:$0x75643120]
        %v1529 = vunpack.c.l.b16 %v1515
        %v1530 = vunpack.c.l.b16 %v1519
        %v1531 = vunpack.c.l.b16 %v1523
        %v1532 = vunpack.c.l.b16 %v1527
        %v1533 = vrot.slane %v1529, 2
        %v1534 = vrot.slane %v1530, 1
        %v1535 = vsel %vm931, %v1534, %v1533
        %v1536 = vsel %vm934, %v1531, %v1535
        %v1537 = vrot.slane %v1532, 7
        %v1538 = vsel %vm937, %v1537, %v1536
        %v1539 = vpack.c.b16 %v1538, %v1538
        %v1540 = vrot.slane %v1539, 2
        %v1543 = vsel %vm898, %v1539, %v1540
        %1545 = vrot.lane.b32.xlu0 %v1543, 96
        %v1546 = vpop.permute.xlu0 %1545
        %1548 = vst.msk [vmem:[#allocation3 + $0x2] sm:$0x3] %vm1197, %v1546
        %1549 = vst.sshfl [vmem:[#allocation1] sm:$0xff pattern:$0x75643120] %v1247
        %s1550 = scalar_lea.vmem [#allocation1], 1
        %v1551 = vld [vmem:[%s1550] ss:$2 sm:$0xff]
        %1552 = vst.sshfl [vmem:[#allocation1 + $0x10] sm:$0xff pattern:$0x75643120] %v1248
        %s1553 = scalar_lea.vmem [#allocation1], 17
        %v1554 = vld [vmem:[%s1553] ss:$2 sm:$0xff]
        %1555 = vst.sshfl [vmem:[#allocation1 + $0x20] sm:$0xff pattern:$0x75643120] %v1249
        %s1556 = scalar_lea.vmem [#allocation1], 33
        %v1557 = vld [vmem:[%s1556] ss:$2 sm:$0xff]
        %1558 = vst.sshfl [vmem:[#allocation1 + $0x30] sm:$0xff pattern:$0x75643120] %v1250
        %s1559 = scalar_lea.vmem [#allocation1], 49
        %v1560 = vld [vmem:[%s1559] ss:$2 sm:$0xff]
        %1561 = vst [vmem:[#allocation1] ss:$2 sm:$0xff] %v1551
        %v1562 = vld.sshfl [vmem:[#allocation1] sm:$0xff pattern:$0x75643120]
        %s1564 = scalar_lea.vmem [#allocation1], 16
        %1565 = vst [vmem:[%s1564] ss:$2 sm:$0xff] %v1554
        %v1566 = vld.sshfl [vmem:[#allocation1 + $0x10] sm:$0xff pattern:$0x75643120]
        %s1568 = scalar_lea.vmem [#allocation1], 32
        %1569 = vst [vmem:[%s1568] ss:$2 sm:$0xff] %v1557
        %v1570 = vld.sshfl [vmem:[#allocation1 + $0x20] sm:$0xff pattern:$0x75643120]
        %s1572 = scalar_lea.vmem [#allocation1], 48
        %1573 = vst [vmem:[%s1572] ss:$2 sm:$0xff] %v1560
        %v1574 = vld.sshfl [vmem:[#allocation1 + $0x30] sm:$0xff pattern:$0x75643120]
        %v1576 = vunpack.c.l.b16 %v1562
        %v1577 = vunpack.c.l.b16 %v1566
        %v1578 = vunpack.c.l.b16 %v1570
        %v1579 = vunpack.c.l.b16 %v1574
        %v1580 = vrot.slane %v1576, 3
        %v1581 = vrot.slane %v1577, 2
        %v1582 = vsel %vm931, %v1581, %v1580
        %v1583 = vrot.slane %v1578, 1
        %v1584 = vsel %vm934, %v1583, %v1582
        %v1585 = vsel %vm937, %v1579, %v1584
        %v1586 = vpack.c.b16 %v1585, %v1585
        %v1587 = vrot.slane %v1586, 2
        %v1590 = vsel %vm898, %v1586, %v1587
        %1592 = vrot.lane.b32.xlu0 %v1590, 112
        %v1593 = vpop.permute.xlu0 %1592
        %1595 = vst.msk [vmem:[#allocation3 + $0x2] sm:$0x3] %vm1245, %v1593
        %v1596 = vld [vmem:[%s3] sm:$0xf]
        %v1597 = vld [vmem:[#allocation3] sm:$0xf]
        %v1598 = vld [vmem:[%s4] sm:$0xff]
        %1600 = vset.pattern.permute.xlu0 0
        %1601 = vperm.xlu0 %1600, %v1598
        %v1602 = vpop.permute.xlu0 %1601
        %1605 = vst [vmem:[#allocation1] ss:$4 sm:$0xff] %v1597
        %v1606 = vld.sshfl [vmem:[#allocation1] sm:$0xff pattern:$0x73625140]
        %v1607 = vld.sshfl [vmem:[#allocation1 + $0x8] sm:$0xff pattern:$0x73625140]
        %vm1608 = vcmask 31744
        %v1610 = vsel %vm1608, %v1596, 0
        %v1612 = vsel %vm898, %v1606, 0
        %v1614 = vsel %vm898, %v1607, 0
        %1616 = vmatpush.bf16.msra.mxu0 0
        %1617 = vmatpush.bf16.msra.mxu0 0
        %1618 = vmatpush.bf16.msra.mxu0 0
        %1619 = vmatpush.bf16.msra.mxu0 0
        %1620 = vmatpush.bf16.msra.mxu0 0
        %1621 = vmatpush.bf16.msra.mxu0 0
        %1622 = vmatpush.bf16.msra.mxu0 0
        %1623 = vmatpush.bf16.msra.mxu0 %v1612
        %1624 = vmatmul.bf16.gmra.mxu0 %v1610
        %v1625 = vpop.f32.mrf.mxu0
        %v1626 = vadd.f32 %v1602, %v1625
        %v1627 = vpop.f32.mrf.mxu0
        %1628 = vdwg.mxu0
        %1629 = vmatpush.bf16.msra.mxu0 0
        %1630 = vmatpush.bf16.msra.mxu0 0
        %1631 = vmatpush.bf16.msra.mxu0 0
        %1632 = vmatpush.bf16.msra.mxu0 0
        %1633 = vmatpush.bf16.msra.mxu0 0
        %1634 = vmatpush.bf16.msra.mxu0 0
        %1635 = vmatpush.bf16.msra.mxu0 0
        %1636 = vmatpush.bf16.msra.mxu0 %v1614
        %1637 = vmatmul.bf16.gmra.mxu0 %v1610
        %v1638 = vpop.f32.mrf.mxu0
        %v1639 = vadd.f32 %v1602, %v1638
        %v1640 = vpop.f32.mrf.mxu0
        %1641 = vdwg.mxu0
        %v1642 = vmax.f32 %v1626, 0.0
        %v1643 = vmax.f32 %v1639, 0.0
        %1644 = vst [vmem:[%s244] sm:$0xff] %v1642
        %1645 = vst [vmem:[%s244 + $0x8] sm:$0xff] %v1643
        %s1646 = sand.u32 %s140, 1
        %s1647 = scalar_lea.sflag [#allocation6], %s1646
        %s1648 = sand.u32 %s140, 1
        %s1649 = smul.addr %s1648, 16
        %s1650 = scalar_lea.vmem [#allocation7], %s1649
        // Predicated region
        $region45: #{tpu_custom_call.1} parent=39 // pred_check
          %p1651 = pneg %p150
        $region46: #{tpu_custom_call.1} parent=39 // pred_check_branch
          %1653 = sbr.rel (%p1651) target = $region48
        $region47: #{tpu_custom_call.1} parent=39 // pred_region
          %1655 = vsyncadd %s1647, 0
          %s1656 = smul.addr %s22, 2
          %s1657 = smul.addr %s1656, 8
          %s1658 = scalar_lea.hbm %s5, %s1657
          %s1660 = sshll.u32 %s1650, 4
          %s1661 = int_to_ptr.vmem [resolvable:$true] %s1660
          %s1662 = sshll.u32 %s1658, 4
          %s1663 = int_to_ptr.hbm [resolvable:$true] %s1662
          %1665 = dma.vmem_to_hbm [thread:$0]  %s1661, 256, %s1663, %s1647
        $region48: #{tpu_custom_call.1} parent=39 // pred_fallthru
          _
      $region40: #{tpu_custom_call.1} parent=5 // pred_fallthru
        _
      %p1666 = scmp.le.s32.totalorder 2, %s17
      // Predicated region
      $region49: #{tpu_custom_call.1} parent=5 // pred_check
        %p1667 = pneg %p1666
      $region50: #{tpu_custom_call.1} parent=5 // pred_check_branch
        %1669 = sbr.rel (%p1667) target = $region52
      $region51: #{tpu_custom_call.1} parent=5 // pred_region
        %s1670 = ssub.s32 %s17, 2
        // Predicated region
        $region53: #{tpu_custom_call.1} parent=51 // pred_check
          %p1671 = pneg %p156
        $region54: #{tpu_custom_call.1} parent=51 // pred_check_branch
          %1673 = sbr.rel (%p1671) target = $region56
        $region55: #{tpu_custom_call.1} parent=51 // pred_region
          %s1674 = sand.u32 %s141, 1
          %s1675 = scalar_lea.sflag [#allocation6], %s1674
          %s1676 = sand.u32 %s141, 1
          %s1677 = smul.addr %s1676, 16
          %s1678 = scalar_lea.vmem [#allocation7], %s1677
          %1680 = dma.done %s1675, 256
        $region56: #{tpu_custom_call.1} parent=51 // pred_fallthru
          _
      $region52: #{tpu_custom_call.1} parent=5 // pred_fallthru
        _
    $region6: #{tpu_custom_call.1} parent=1 // loop_footer
      %s21 = sadd.s32 1, %s17
    $region7: #{tpu_custom_call.1} parent=1 // loop_footer_branch
      %16 = sbr.rel target = $region3
    $region8: #{tpu_custom_call.1} parent=1 // loop_exit
      _
    %1681 = vsyncpa [#allocation5], 1
    %s1682 = scalar_lea.sflag [#allocation5], 1
    %1683 = vsyncpa %s1682, 1
    %1684 = vsyncpa [#allocation6], 1
    %s1685 = scalar_lea.sflag [#allocation6], 1
    %1686 = vsyncpa %s1685, 1

</llo_original>
